<compile_context>
chip_gen: v6e
topology: v6e:2x2x1
jax: 0.10.0
libtpu: 0.0.40
codegen_flags: <defaults>
</compile_context>

<pallas_src>
import functools

import jax
import jax.numpy as jnp
from jax import lax
from jax.experimental import pallas as pl
from jax.experimental.pallas import tpu as pltpu

# hard_concrete constants (from the PyTorch reference)
BETA = 2.0 / 3.0
GAMMA = -0.1
ZETA = 1.1
EPS_ZERO = 1e-8    # replace_zero(): swap exact zeros for a tiny epsilon
U_EPS = 1e-6       # clamp uniform noise away from {0, 1}


def _make_tcg_kernel(T, B, N, inst_w, lag_w):
    """Build the fused kernel with T/B/N and mixing weights baked in as trace-time constants."""
    inv_beta = 1.0 / BETA
    inv3 = 1.0 / 3.0
    inv_tm1 = 1.0 / float(T - 1)

    def kernel(x2_ref,    # (T*B, H)  VMEM  sequence-flattened input
               wp_ref,    # (H, N)    VMEM  projection weight
               b_ref,     # (1, N)    VMEM  projection bias
               w_ref,     # (T, 1, 1) VMEM  decreasing-weights schedule
               es_ref,    # (3, N, N) VMEM  [edge_score_now, edge_score_lag, prior_adj]
               u_ref,     # (T, N, N) VMEM  uniform noise for hard_concrete
               out_ref):  # (3, N, N) out   [adj_now, adj_lag, adj_mat]
        # 1) x_projection2, batched over all time steps: one bf16 MXU matmul, f32 accumulate.
        x_all = jnp.dot(x2_ref[...].astype(jnp.bfloat16),
                        wp_ref[...].astype(jnp.bfloat16),
                        preferred_element_type=jnp.float32) + b_ref[...]      # (T*B, N) f32

        # 2) all T grams with a single batched dot_general (contract the batch dim B):
        #    gram[t, k, j] = sum_b x[t, b, k] * x[t, b, j]    (einsum 'bk,bj->kj' per t)
        x3 = x_all.reshape(T, B, N)          # layout-preserving split (B is a sublane multiple)
        gram = lax.dot_general(
            x3, x3,
            dimension_numbers=(((1,), (1,)), ((0,), (0,))),
            preferred_element_type=jnp.float32)                                # (T, N, N) f32

        # 3) batched elementwise chain over all T slabs at once (f32 on VPU/EUP).
        w3 = w_ref[...]                          # (T, 1, 1)
        esn = es_ref[0]                          # (N, N)
        esl = es_ref[1]                          # (N, N)
        prior_third = es_ref[2] * inv3           # (N, N), hoisted

        t_idx = lax.broadcasted_iota(jnp.int32, (T, N, N), 0)
        es_all = jnp.where(t_idx == 0, esn, esl)                               # (T, N, N)

        # hard_concrete(edge_score * w[t]) with pre-sampled uniform noise.
        u = jnp.clip(u_ref[...], U_EPS, 1.0 - U_EPS)
        logit_u = jnp.log(u) - jnp.log(1.0 - u)
        s = jax.nn.sigmoid((logit_u + es_all * w3) * inv_beta)
        hc = jnp.clip(s * (ZETA - GAMMA) + GAMMA, 0.0, 1.0)

        lag_all = hc * inv3 + prior_third + jax.nn.sigmoid(gram * w3) * inv3   # (T, N, N)
        # replace_zero(): no exact zeros in the adjacency estimate.
        # TODO(synk): swap in the true replace_zero if its source becomes available.
        lag_all = jnp.where(lag_all == 0.0, EPS_ZERO, lag_all)

        adj_now = lag_all[0]
        adj_lag = (jnp.sum(lag_all, axis=0) - adj_now) * inv_tm1               # mean over t>=1

        # fused epilogue: module side-effect self.adj_mat with zeroed diagonal.
        am = jax.nn.sigmoid(adj_now * inst_w + adj_lag * lag_w)
        row = lax.broadcasted_iota(jnp.int32, (N, N), 0)
        col = lax.broadcasted_iota(jnp.int32, (N, N), 1)
        am = jnp.where(row == col, 0.0, am)

        # single packed output, each slab written exactly once.
        out_ref[0] = adj_now
        out_ref[1] = adj_lag
        out_ref[2] = am

    return kernel


@functools.partial(jax.jit, static_argnames=("instantaneous_weight", "lag_weight"))
def temporal_causal_graph(X_transformed, u, weights_schedule,
                          wp, b, edge_score_now, edge_score_lag, prior_adj,
                          instantaneous_weight=0.5, lag_weight=0.5):
    T, B, H = X_transformed.shape
    N = wp.shape[1]
    if T < 2:
        raise ValueError("TemporalCausalGraph forward requires T >= 2 "
                         "(the reference divides by len(lag_mats[1:])).")

    # Cheap layout plumbing (all fused into one prep fusion under jit).
    x2 = X_transformed.reshape(T * B, H).astype(jnp.float32)
    w3 = weights_schedule.reshape(T, 1, 1).astype(jnp.float32)
    es_pack = jnp.stack(
        [edge_score_now, edge_score_lag, prior_adj], axis=0).astype(jnp.float32)  # (3, N, N)

    vmem = pltpu.MemorySpace.VMEM
    out = pl.pallas_call(
        _make_tcg_kernel(T, B, N, float(instantaneous_weight), float(lag_weight)),
        out_shape=jax.ShapeDtypeStruct((3, N, N), jnp.float32),
        in_specs=[
            pl.BlockSpec(memory_space=vmem),   # x2       (T*B, H)
            pl.BlockSpec(memory_space=vmem),   # wp       (H, N)
            pl.BlockSpec(memory_space=vmem),   # bias     (1, N)
            pl.BlockSpec(memory_space=vmem),   # weights  (T, 1, 1)
            pl.BlockSpec(memory_space=vmem),   # es_pack  (3, N, N)
            pl.BlockSpec(memory_space=vmem),   # u noise  (T, N, N)
        ],
        out_specs=pl.BlockSpec(memory_space=vmem),
    )(x2, wp.astype(jnp.float32), b.reshape(1, N).astype(jnp.float32),
      w3, es_pack, u.astype(jnp.float32))

    return out[0], out[1], out[2]


if __name__ == "__main__":
    # Small deterministic configuration: T time steps, batch B, hidden H, num_nodes N.
    T, B, H, N = 8, 8, 32, 8

    key = jax.random.PRNGKey(0)
    k1, k2, k3, k4, k5, k6 = jax.random.split(key, 6)

    # Inputs / parameters (deterministic, built in-script; no checkpoint load).
    X_transformed = jax.random.normal(k1, (T, B, H), jnp.float32)
    wp = jax.random.normal(k2, (H, N), jnp.float32) / jnp.sqrt(jnp.float32(H))   # Linear weight
    bias = jax.random.normal(k3, (1, N), jnp.float32) * 0.01                     # Linear bias
    edge_score_now = jax.random.normal(k4, (N, N), jnp.float32) * 0.1
    edge_score_lag = jax.random.normal(k5, (N, N), jnp.float32) * 0.1
    prior_adj = jnp.zeros((N, N), jnp.float32)

    # hard_concrete noise (torch.rand_like equivalent), pre-sampled for determinism;
    # the kernel clamps it away from {0, 1}.
    u_noise = jax.random.uniform(k6, (T, N, N), jnp.float32)

    # generate_decreasing_weights(time_steps, start=0.1): source not provided.
    # Deterministic stand-in: linearly decreasing from `start` toward 0.
    # TODO(synk): swap in the exact generate_decreasing_weights schedule if available.
    weights_schedule = 0.1 * (T - jnp.arange(T, dtype=jnp.float32)) / jnp.float32(T)

    adj_now, adj_lag, adj_mat = temporal_causal_graph(
        X_transformed, u_noise, weights_schedule,
        wp, bias, edge_score_now, edge_score_lag, prior_adj)

    jax.block_until_ready((adj_now, adj_lag, adj_mat))
    assert adj_now.shape == (N, N) and adj_lag.shape == (N, N) and adj_mat.shape == (N, N)
    assert bool(jnp.all(jnp.isfinite(adj_now))) and bool(jnp.all(jnp.isfinite(adj_lag)))
    assert bool(jnp.all(jnp.diag(adj_mat) == 0.0))
    print("KERNEL_OK")
</pallas_src>

<mosaic_0001>
module attributes {stable_mosaic.version = 11 : i64} {
  func.func @kernel(%arg0: memref<64x32xf32, #tpu.memory_space<vmem>>, %arg1: memref<32x8xf32, #tpu.memory_space<vmem>>, %arg2: memref<1x8xf32, #tpu.memory_space<vmem>>, %arg3: memref<8x1x1xf32, #tpu.memory_space<vmem>>, %arg4: memref<3x8x8xf32, #tpu.memory_space<vmem>>, %arg5: memref<8x8x8xf32, #tpu.memory_space<vmem>>, %arg6: memref<3x8x8xf32, #tpu.memory_space<vmem>>) attributes {dimension_semantics = [], scalar_prefetch = 0 : i64, scratch_operands = 0 : i64, tpu.core_type = #tpu.core_type<tc>} {
    %c0 = arith.constant 0 : index
    %c0_0 = arith.constant 0 : index
    %0 = vector.load %arg0[%c0, %c0_0] : memref<64x32xf32, #tpu.memory_space<vmem>>, vector<64x32xf32>
    %1 = arith.truncf %0 : vector<64x32xf32> to vector<64x32xbf16>
    %c0_1 = arith.constant 0 : index
    %c0_2 = arith.constant 0 : index
    %2 = vector.load %arg1[%c0_1, %c0_2] : memref<32x8xf32, #tpu.memory_space<vmem>>, vector<32x8xf32>
    %3 = arith.truncf %2 : vector<32x8xf32> to vector<32x8xbf16>
    %cst = arith.constant dense<0.000000e+00> : vector<64x8xf32>
    %4 = tpu.matmul %1, %3, %cst {dimension_numbers = #tpu.dot_dimension_numbers<[1], [0], [0], [1], [0, 0, 1, 1], [], []>} : vector<64x32xbf16>, vector<32x8xbf16>, vector<64x8xf32> -> vector<64x8xf32>
    %c0_3 = arith.constant 0 : index
    %c0_4 = arith.constant 0 : index
    %5 = vector.load %arg2[%c0_3, %c0_4] : memref<1x8xf32, #tpu.memory_space<vmem>>, vector<1x8xf32>
    %6 = vector.broadcast %5 : vector<1x8xf32> to vector<64x8xf32>
    %7 = arith.addf %4, %6 : vector<64x8xf32>
    %8 = vector.shape_cast %7 : vector<64x8xf32> to vector<8x8x8xf32>
    %cst_5 = arith.constant dense<0.000000e+00> : vector<8x8x8xf32>
    %9 = tpu.matmul %8, %8, %cst_5 {dimension_numbers = #tpu.dot_dimension_numbers<[1], [1], [2], [2], [0, 0, 0, 2, 1, 2], [0], [0]>} : vector<8x8x8xf32>, vector<8x8x8xf32>, vector<8x8x8xf32> -> vector<8x8x8xf32>
    %c0_6 = arith.constant 0 : index
    %c0_7 = arith.constant 0 : index
    %c0_8 = arith.constant 0 : index
    %10 = vector.load %arg3[%c0_6, %c0_7, %c0_8] : memref<8x1x1xf32, #tpu.memory_space<vmem>>, vector<8x1x1xf32>
    %c0_9 = arith.constant 0 : index
    %c0_10 = arith.constant 0 : index
    %c0_11 = arith.constant 0 : index
    %11 = vector.load %arg4[%c0_9, %c0_10, %c0_11] : memref<3x8x8xf32, #tpu.memory_space<vmem>>, vector<1x8x8xf32>
    %12 = vector.shape_cast %11 : vector<1x8x8xf32> to vector<8x8xf32>
    %c1 = arith.constant 1 : index
    %c0_12 = arith.constant 0 : index
    %c0_13 = arith.constant 0 : index
    %13 = vector.load %arg4[%c1, %c0_12, %c0_13] : memref<3x8x8xf32, #tpu.memory_space<vmem>>, vector<1x8x8xf32>
    %14 = vector.shape_cast %13 : vector<1x8x8xf32> to vector<8x8xf32>
    %c2 = arith.constant 2 : index
    %c0_14 = arith.constant 0 : index
    %c0_15 = arith.constant 0 : index
    %15 = vector.load %arg4[%c2, %c0_14, %c0_15] : memref<3x8x8xf32, #tpu.memory_space<vmem>>, vector<1x8x8xf32>
    %16 = vector.shape_cast %15 : vector<1x8x8xf32> to vector<8x8xf32>
    %cst_16 = arith.constant 0.333333343 : f32
    %17 = vector.broadcast %cst_16 : f32 to vector<8x8xf32>
    %18 = arith.mulf %16, %17 : vector<8x8xf32>
    %19 = tpu.iota {dimensions = array<i32: 0>} : vector<8x8x8xi32>
    %c0_i32 = arith.constant 0 : i32
    %20 = vector.broadcast %c0_i32 : i32 to vector<8x8x8xi32>
    %21 = arith.cmpi eq, %19, %20 : vector<8x8x8xi32>
    %22 = vector.shape_cast %12 : vector<8x8xf32> to vector<1x8x8xf32>
    %23 = vector.broadcast %22 : vector<1x8x8xf32> to vector<8x8x8xf32>
    %24 = vector.shape_cast %14 : vector<8x8xf32> to vector<1x8x8xf32>
    %25 = vector.broadcast %24 : vector<1x8x8xf32> to vector<8x8x8xf32>
    %26 = arith.select %21, %23, %25 : vector<8x8x8xi1>, vector<8x8x8xf32>
    %c0_17 = arith.constant 0 : index
    %c0_18 = arith.constant 0 : index
    %c0_19 = arith.constant 0 : index
    %27 = vector.load %arg5[%c0_17, %c0_18, %c0_19] : memref<8x8x8xf32, #tpu.memory_space<vmem>>, vector<8x8x8xf32>
    %cst_20 = arith.constant 9.99999997E-7 : f32
    %cst_21 = arith.constant 0.999998986 : f32
    %28 = vector.broadcast %cst_20 : f32 to vector<8x8x8xf32>
    %29 = arith.maximumf %28, %27 : vector<8x8x8xf32>
    %30 = vector.broadcast %cst_21 : f32 to vector<8x8x8xf32>
    %31 = arith.minimumf %30, %29 : vector<8x8x8xf32>
    %32 = math.log %31 : vector<8x8x8xf32>
    %cst_22 = arith.constant 1.000000e+00 : f32
    %33 = vector.broadcast %cst_22 : f32 to vector<8x8x8xf32>
    %34 = arith.subf %33, %31 : vector<8x8x8xf32>
    %35 = math.log %34 : vector<8x8x8xf32>
    %36 = arith.subf %32, %35 : vector<8x8x8xf32>
    %37 = vector.broadcast %10 : vector<8x1x1xf32> to vector<8x8x8xf32>
    %38 = arith.mulf %26, %37 : vector<8x8x8xf32>
    %39 = arith.addf %36, %38 : vector<8x8x8xf32>
    %cst_23 = arith.constant 1.500000e+00 : f32
    %40 = vector.broadcast %cst_23 : f32 to vector<8x8x8xf32>
    %41 = arith.mulf %39, %40 : vector<8x8x8xf32>
    %42 = arith.negf %41 : vector<8x8x8xf32>
    %43 = math.exp %42 : vector<8x8x8xf32>
    %cst_24 = arith.constant 1.000000e+00 : f32
    %44 = vector.broadcast %cst_24 : f32 to vector<8x8x8xf32>
    %45 = arith.addf %44, %43 : vector<8x8x8xf32>
    %46 = arith.divf %44, %45 : vector<8x8x8xf32>
    %cst_25 = arith.constant 1.200000e+00 : f32
    %47 = vector.broadcast %cst_25 : f32 to vector<8x8x8xf32>
    %48 = arith.mulf %46, %47 : vector<8x8x8xf32>
    %cst_26 = arith.constant -1.000000e-01 : f32
    %49 = vector.broadcast %cst_26 : f32 to vector<8x8x8xf32>
    %50 = arith.addf %48, %49 : vector<8x8x8xf32>
    %cst_27 = arith.constant 0.000000e+00 : f32
    %cst_28 = arith.constant 1.000000e+00 : f32
    %51 = vector.broadcast %cst_27 : f32 to vector<8x8x8xf32>
    %52 = arith.maximumf %51, %50 : vector<8x8x8xf32>
    %53 = vector.broadcast %cst_28 : f32 to vector<8x8x8xf32>
    %54 = arith.minimumf %53, %52 : vector<8x8x8xf32>
    %cst_29 = arith.constant 0.333333343 : f32
    %55 = vector.broadcast %cst_29 : f32 to vector<8x8x8xf32>
    %56 = arith.mulf %54, %55 : vector<8x8x8xf32>
    %57 = vector.shape_cast %18 : vector<8x8xf32> to vector<1x8x8xf32>
    %58 = vector.broadcast %57 : vector<1x8x8xf32> to vector<8x8x8xf32>
    %59 = arith.addf %56, %58 : vector<8x8x8xf32>
    %60 = vector.broadcast %10 : vector<8x1x1xf32> to vector<8x8x8xf32>
    %61 = arith.mulf %9, %60 : vector<8x8x8xf32>
    %62 = arith.negf %61 : vector<8x8x8xf32>
    %63 = math.exp %62 : vector<8x8x8xf32>
    %cst_30 = arith.constant 1.000000e+00 : f32
    %64 = vector.broadcast %cst_30 : f32 to vector<8x8x8xf32>
    %65 = arith.addf %64, %63 : vector<8x8x8xf32>
    %66 = arith.divf %64, %65 : vector<8x8x8xf32>
    %cst_31 = arith.constant 0.333333343 : f32
    %67 = vector.broadcast %cst_31 : f32 to vector<8x8x8xf32>
    %68 = arith.mulf %66, %67 : vector<8x8x8xf32>
    %69 = arith.addf %59, %68 : vector<8x8x8xf32>
    %cst_32 = arith.constant 0.000000e+00 : f32
    %70 = vector.broadcast %cst_32 : f32 to vector<8x8x8xf32>
    %71 = arith.cmpf oeq, %69, %70 : vector<8x8x8xf32>
    %cst_33 = arith.constant 9.99999993E-9 : f32
    %72 = vector.broadcast %cst_33 : f32 to vector<8x8x8xf32>
    %73 = arith.select %71, %72, %69 : vector<8x8x8xi1>, vector<8x8x8xf32>
    %74 = vector.extract_strided_slice %73 {offsets = [0, 0, 0], sizes = [1, 8, 8], strides = [1, 1, 1]} : vector<8x8x8xf32> to vector<1x8x8xf32>
    %75 = vector.shape_cast %74 : vector<1x8x8xf32> to vector<8x8xf32>
    %cst_34 = arith.constant dense<0.000000e+00> : vector<8x8xf32>
    %76 = vector.multi_reduction <add>, %73, %cst_34 [0] : vector<8x8x8xf32> to vector<8x8xf32>
    %77 = arith.subf %76, %75 : vector<8x8xf32>
    %cst_35 = arith.constant 0.142857149 : f32
    %78 = vector.broadcast %cst_35 : f32 to vector<8x8xf32>
    %79 = arith.mulf %77, %78 : vector<8x8xf32>
    %cst_36 = arith.constant 5.000000e-01 : f32
    %80 = vector.broadcast %cst_36 : f32 to vector<8x8xf32>
    %81 = arith.mulf %75, %80 : vector<8x8xf32>
    %cst_37 = arith.constant 5.000000e-01 : f32
    %82 = vector.broadcast %cst_37 : f32 to vector<8x8xf32>
    %83 = arith.mulf %79, %82 : vector<8x8xf32>
    %84 = arith.addf %81, %83 : vector<8x8xf32>
    %85 = arith.negf %84 : vector<8x8xf32>
    %86 = math.exp %85 : vector<8x8xf32>
    %cst_38 = arith.constant 1.000000e+00 : f32
    %87 = vector.broadcast %cst_38 : f32 to vector<8x8xf32>
    %88 = arith.addf %87, %86 : vector<8x8xf32>
    %89 = arith.divf %87, %88 : vector<8x8xf32>
    %90 = tpu.iota {dimensions = array<i32: 0>} : vector<8x8xi32>
    %91 = tpu.iota {dimensions = array<i32: 1>} : vector<8x8xi32>
    %92 = arith.cmpi eq, %90, %91 : vector<8x8xi32>
    %cst_39 = arith.constant 0.000000e+00 : f32
    %93 = vector.broadcast %cst_39 : f32 to vector<8x8xf32>
    %94 = arith.select %92, %93, %89 : vector<8x8xi1>, vector<8x8xf32>
    %c0_40 = arith.constant 0 : index
    %c0_41 = arith.constant 0 : index
    %c0_42 = arith.constant 0 : index
    %95 = vector.load %arg6[%c0_40, %c0_41, %c0_42] : memref<3x8x8xf32, #tpu.memory_space<vmem>>, vector<1x8x8xf32>
    %96 = vector.shape_cast %95 : vector<1x8x8xf32> to vector<8x8xf32>
    %97 = vector.shape_cast %75 : vector<8x8xf32> to vector<1x8x8xf32>
    tpu.vector_store %arg6[%c0_40, %c0_41, %c0_42], %97 {strides = array<i32>} : memref<3x8x8xf32, #tpu.memory_space<vmem>>, vector<1x8x8xf32>,
    %c1_43 = arith.constant 1 : index
    %c0_44 = arith.constant 0 : index
    %c0_45 = arith.constant 0 : index
    %98 = vector.load %arg6[%c1_43, %c0_44, %c0_45] : memref<3x8x8xf32, #tpu.memory_space<vmem>>, vector<1x8x8xf32>
    %99 = vector.shape_cast %98 : vector<1x8x8xf32> to vector<8x8xf32>
    %100 = vector.shape_cast %79 : vector<8x8xf32> to vector<1x8x8xf32>
    tpu.vector_store %arg6[%c1_43, %c0_44, %c0_45], %100 {strides = array<i32>} : memref<3x8x8xf32, #tpu.memory_space<vmem>>, vector<1x8x8xf32>,
    %c2_46 = arith.constant 2 : index
    %c0_47 = arith.constant 0 : index
    %c0_48 = arith.constant 0 : index
    %101 = vector.load %arg6[%c2_46, %c0_47, %c0_48] : memref<3x8x8xf32, #tpu.memory_space<vmem>>, vector<1x8x8xf32>
    %102 = vector.shape_cast %101 : vector<1x8x8xf32> to vector<8x8xf32>
    %103 = vector.shape_cast %94 : vector<8x8xf32> to vector<1x8x8xf32>
    tpu.vector_store %arg6[%c2_46, %c0_47, %c0_48], %103 {strides = array<i32>} : memref<3x8x8xf32, #tpu.memory_space<vmem>>, vector<1x8x8xf32>,
    return
  }
}

</mosaic_0001>

<llo_original>
// kernel: temporal_causal_graph.1
$region0: #{temporal_causal_graph.1}
  #allocation0 [shape = 'u32[]', space=smem, size = 0x4, offset = 0x4, fixed_abs, tag = 'smem constant byte address 0x4 - core index']
  #allocation1 [shape = 'u32[144,128]{1,0:T(1,128)}', space=vmem, size = 0x12000, scoped, tag = 'internal scratch']
  %s0 = inlined_call_operand.vmem [shape: f32[64,32], index: 0, kind: input, shape index: {}]
  %s1 = inlined_call_operand.vmem [shape: f32[32,8], index: 1, kind: input, shape index: {}]
  %s2 = inlined_call_operand.vmem [shape: f32[1,8], index: 2, kind: input, shape index: {}]
  %s3 = inlined_call_operand.vmem [shape: f32[8,1,1], index: 3, kind: input, shape index: {}]
  %s4 = inlined_call_operand.vmem [shape: f32[3,8,8], index: 4, kind: input, shape index: {}]
  %s5 = inlined_call_operand.hbm [shape: f32[8,8,8], index: 5, kind: input, shape index: {}]
  %s6 = inlined_call_operand.vmem [shape: f32[3,8,8], index: 6, kind: output, shape index: {}]
  %s7 = sld [smem:[#allocation0]]
  $region38: #{temporal_causal_graph.1} parent=0
    _
  %s9 = ssub.s32 1, %s7
  %s10 = scalar_select 0, %s9, %s7
  $region1: #{temporal_causal_graph.1} parent=0
    #allocation2 [shape = 'u8[32768]{0}', space=vmem, size = 0x8000, scoped, tag = 'input window, operand 5, single buffered']
    #allocation3 [shape = 's32[1]{0}', space=sflag, size = 0x4, scoped, tag = 'scoped memory for temporal_causal_graph.1']
    %11 = vsyncpa [#allocation3], 0
    // Predicated region
    $region2: #{temporal_causal_graph.1} parent=1 // pred_check
      _
    $region3: #{temporal_causal_graph.1} parent=1 // pred_check_branch
      %13 = sbr.rel (0) target = $region5
    $region4: #{temporal_causal_graph.1} parent=1 // pred_region
      _
    $region5: #{temporal_causal_graph.1} parent=1 // pred_fallthru
      _
    // Predicated region
    $region6: #{temporal_causal_graph.1} parent=1 // pred_check
      _
    $region7: #{temporal_causal_graph.1} parent=1 // pred_check_branch
      %15 = sbr.rel (0) target = $region9
    $region8: #{temporal_causal_graph.1} parent=1 // pred_region
      _
    $region9: #{temporal_causal_graph.1} parent=1 // pred_fallthru
      _
    // Predicated region
    $region10: #{temporal_causal_graph.1} parent=1 // pred_check
      _
    $region11: #{temporal_causal_graph.1} parent=1 // pred_check_branch
      %17 = sbr.rel (0) target = $region13
    $region12: #{temporal_causal_graph.1} parent=1 // pred_region
      _
    $region13: #{temporal_causal_graph.1} parent=1 // pred_fallthru
      _
    // Predicated region
    $region14: #{temporal_causal_graph.1} parent=1 // pred_check
      _
    $region15: #{temporal_causal_graph.1} parent=1 // pred_check_branch
      %19 = sbr.rel (0) target = $region17
    $region16: #{temporal_causal_graph.1} parent=1 // pred_region
      _
    $region17: #{temporal_causal_graph.1} parent=1 // pred_fallthru
      _
    // Predicated region
    $region18: #{temporal_causal_graph.1} parent=1 // pred_check
      _
    $region19: #{temporal_causal_graph.1} parent=1 // pred_check_branch
      %21 = sbr.rel (0) target = $region21
    $region20: #{temporal_causal_graph.1} parent=1 // pred_region
      _
    $region21: #{temporal_causal_graph.1} parent=1 // pred_fallthru
      _
    // Predicated region
    $region22: #{temporal_causal_graph.1} parent=1 // pred_check
      _
    $region23: #{temporal_causal_graph.1} parent=1 // pred_check_branch
      %23 = sbr.rel (0) target = $region25
    $region24: #{temporal_causal_graph.1} parent=1 // pred_region
      %s25 = ssub.s32 1024, 1024
      %26 = vsyncadd [#allocation3], %s25
      %s27 = sshll.u32 [#allocation2], 4
      %s28 = int_to_ptr.vmem [resolvable:$true] %s27
      %33 = dma.hbm_to_vmem [thread:$0]  %s5, 1024, %s28, [#allocation3], 128, 128, 8
    $region25: #{temporal_causal_graph.1} parent=1 // pred_fallthru
      _
    // Predicated region
    $region26: #{temporal_causal_graph.1} parent=1 // pred_check
      _
    $region27: #{temporal_causal_graph.1} parent=1 // pred_check_branch
      %35 = sbr.rel (0) target = $region29
    $region28: #{temporal_causal_graph.1} parent=1 // pred_region
      %36 = dma.done [#allocation3], 1024
    $region29: #{temporal_causal_graph.1} parent=1 // pred_fallthru
      _
    %v38 = vld [vmem:[%s0] sm:$0xff]
    %v39 = vld [vmem:[%s0 + $0x8] sm:$0xff]
    %v40 = vld [vmem:[%s0 + $0x10] sm:$0xff]
    %v41 = vld [vmem:[%s0 + $0x18] sm:$0xff]
    %v42 = vld [vmem:[%s0 + $0x20] sm:$0xff]
    %v43 = vld [vmem:[%s0 + $0x28] sm:$0xff]
    %v44 = vld [vmem:[%s0 + $0x30] sm:$0xff]
    %v45 = vld [vmem:[%s0 + $0x38] sm:$0xff]
    %v46 = vpack.c.bf16 %v39, %v38
    %v47 = vpack.c.bf16 %v41, %v40
    %v48 = vpack.c.bf16 %v43, %v42
    %v49 = vpack.c.bf16 %v45, %v44
    %v50 = vld [vmem:[%s1] sm:$0xff]
    %v51 = vld [vmem:[%s1 + $0x8] sm:$0xff]
    %v52 = vld [vmem:[%s1 + $0x10] sm:$0xff]
    %v53 = vld [vmem:[%s1 + $0x18] sm:$0xff]
    %v54 = vpack.c.bf16 %v51, %v50
    %v55 = vpack.c.bf16 %v53, %v52
    %v56 = vld [vmem:[%s2] sm:$0x1]
    %v58 = vlaneseq
    %v59 = vshrl.u32 %v58, 7
    %v60 = vsub.s32 0, %v59
    %v61 = vrot.slane %v56, %v60
    %vm63 = vcmask 261120
    %v65 = vsel %vm63, %v46, 0
    %v68 = vsel %vm63, %v47, 0
    %v71 = vsel %vm63, %v48, 0
    %v74 = vsel %vm63, %v49, 0
    %76 = vmatprep.subr.bf16.mxu0 0
    %77 = vmatpush1.bf16.msra.mxu0 0
    %78 = vmatprep.subr.bf16.mxu0 0
    %79 = vmatpush1.bf16.msra.mxu0 0
    %80 = vmatprep.subr.bf16.mxu0 0
    %81 = vmatpush1.bf16.msra.mxu0 0
    %82 = vmatprep.subr.bf16.mxu0 0
    %83 = vmatpush1.bf16.msra.mxu0 0
    %84 = vmatprep.subr.bf16.mxu0 0
    %85 = vmatpush1.bf16.msra.mxu0 0
    %86 = vmatprep.subr.bf16.mxu0 0
    %87 = vmatpush1.bf16.msra.mxu0 0
    %88 = vmatprep.subr.bf16.mxu0 0
    %89 = vmatpush1.bf16.msra.mxu0 %v55
    %90 = vmatprep.subr.bf16.mxu0 0
    %91 = vmatpush1.bf16.msra.mxu0 %v54
    %92 = vmatprep.subr.bf16.mxu0 0
    %93 = vmatpush2.bf16.msra.mxu0 0
    %94 = vmatprep.subr.bf16.mxu0 0
    %95 = vmatpush2.bf16.msra.mxu0 0
    %96 = vmatprep.subr.bf16.mxu0 0
    %97 = vmatpush2.bf16.msra.mxu0 0
    %98 = vmatprep.subr.bf16.mxu0 0
    %99 = vmatpush2.bf16.msra.mxu0 0
    %100 = vmatprep.subr.bf16.mxu0 0
    %101 = vmatpush2.bf16.msra.mxu0 0
    %102 = vmatprep.subr.bf16.mxu0 0
    %103 = vmatpush2.bf16.msra.mxu0 0
    %104 = vmatprep.subr.bf16.mxu0 0
    %105 = vmatpush2.bf16.msra.mxu0 0
    %106 = vmatprep.subr.bf16.mxu0 0
    %107 = vmatpush2.bf16.msra.mxu0 0
    %108 = vmatprep.mubr.bf16.mxu0 0
    %109 = vmatmul.mubr.bf16.gmra.mxu0 %v65
    %v110 = vpop.f32.mrf.mxu0
    %v111 = vadd.f32 %v61, %v110
    %v112 = vpop.f32.mrf.mxu0
    %v113 = vpop.f32.mrf.mxu0
    %v114 = vadd.f32 %v61, %v113
    %v115 = vpop.f32.mrf.mxu0
    %116 = vmatprep.mubr.bf16.mxu0 0
    %117 = vmatmul.mubr.bf16.gmra.mxu0 %v68
    %v118 = vpop.f32.mrf.mxu0
    %v119 = vadd.f32 %v61, %v118
    %v120 = vpop.f32.mrf.mxu0
    %v121 = vpop.f32.mrf.mxu0
    %v122 = vadd.f32 %v61, %v121
    %v123 = vpop.f32.mrf.mxu0
    %124 = vmatprep.mubr.bf16.mxu0 0
    %125 = vmatmul.mubr.bf16.gmra.mxu0 %v71
    %v126 = vpop.f32.mrf.mxu0
    %v127 = vadd.f32 %v61, %v126
    %v128 = vpop.f32.mrf.mxu0
    %v129 = vpop.f32.mrf.mxu0
    %v130 = vadd.f32 %v61, %v129
    %v131 = vpop.f32.mrf.mxu0
    %132 = vmatprep.mubr.bf16.mxu0 0
    %133 = vmatmul.mubr.bf16.gmra.mxu0 %v74
    %v134 = vpop.f32.mrf.mxu0
    %v135 = vadd.f32 %v61, %v134
    %v136 = vpop.f32.mrf.mxu0
    %v137 = vpop.f32.mrf.mxu0
    %v138 = vadd.f32 %v61, %v137
    %v139 = vpop.f32.mrf.mxu0
    %140 = vdwg.mxu0
    %141 = vxpose.xlu0.b32.start [1/16] %v111, 128
    %142 = vxpose.xlu0.b32.cont [2/16] 0.0, 128
    %143 = vxpose.xlu0.b32.cont [3/16] 0.0, 128
    %144 = vxpose.xlu0.b32.cont [4/16] 0.0, 128
    %145 = vxpose.xlu0.b32.cont [5/16] 0.0, 128
    %146 = vxpose.xlu0.b32.cont [6/16] 0.0, 128
    %147 = vxpose.xlu0.b32.cont [7/16] 0.0, 128
    %148 = vxpose.xlu0.b32.cont [8/16] 0.0, 128
    %149 = vxpose.xlu0.b32.cont [9/16] 0.0, 128
    %150 = vxpose.xlu0.b32.cont [10/16] 0.0, 128
    %151 = vxpose.xlu0.b32.cont [11/16] 0.0, 128
    %152 = vxpose.xlu0.b32.cont [12/16] 0.0, 128
    %153 = vxpose.xlu0.b32.cont [13/16] 0.0, 128
    %154 = vxpose.xlu0.b32.cont [14/16] 0.0, 128
    %155 = vxpose.xlu0.b32.cont [15/16] 0.0, 128
    %156 = vxpose.xlu0.b32.end [16/16] 0.0, 128
    %v157 = vpop.trf.xlu0
    %v158 = vpop.trf.xlu0
    %v159 = vpop.trf.xlu0
    %v160 = vpop.trf.xlu0
    %v161 = vpop.trf.xlu0
    %v162 = vpop.trf.xlu0
    %v163 = vpop.trf.xlu0
    %v164 = vpop.trf.xlu0
    %v165 = vpop.trf.xlu0
    %v166 = vpop.trf.xlu0
    %v167 = vpop.trf.xlu0
    %v168 = vpop.trf.xlu0
    %v169 = vpop.trf.xlu0
    %v170 = vpop.trf.xlu0
    %v171 = vpop.trf.xlu0
    %v172 = vpop.trf.xlu0
    %vm173 = vcmask 64512
    %v175 = vsel %vm173, %v157, 0
    %177 = vmatprep.subr.mxu0 0.0
    %178 = vmatpush1.msra.mxu0 0.0
    %179 = vmatprep.subr.mxu0 0.0
    %180 = vmatpush1.msra.mxu0 0.0
    %181 = vmatprep.subr.mxu0 0.0
    %182 = vmatpush1.msra.mxu0 0.0
    %183 = vmatprep.subr.mxu0 0.0
    %184 = vmatpush1.msra.mxu0 0.0
    %185 = vmatprep.subr.mxu0 0.0
    %186 = vmatpush1.msra.mxu0 0.0
    %187 = vmatprep.subr.mxu0 0.0
    %188 = vmatpush1.msra.mxu0 0.0
    %189 = vmatprep.subr.mxu0 0.0
    %190 = vmatpush1.msra.mxu0 0.0
    %191 = vmatprep.subr.mxu0 0.0
    %192 = vmatpush1.msra.mxu0 0.0
    %193 = vmatprep.subr.mxu0 0.0
    %194 = vmatpush1.msra.mxu0 0.0
    %195 = vmatprep.subr.mxu0 0.0
    %196 = vmatpush1.msra.mxu0 0.0
    %197 = vmatprep.subr.mxu0 0.0
    %198 = vmatpush1.msra.mxu0 0.0
    %199 = vmatprep.subr.mxu0 0.0
    %200 = vmatpush1.msra.mxu0 0.0
    %201 = vmatprep.subr.mxu0 0.0
    %202 = vmatpush1.msra.mxu0 0.0
    %203 = vmatprep.subr.mxu0 0.0
    %204 = vmatpush1.msra.mxu0 0.0
    %205 = vmatprep.subr.mxu0 0.0
    %206 = vmatpush1.msra.mxu0 0.0
    %207 = vmatprep.subr.mxu0 0.0
    %208 = vmatpush1.msra.mxu0 %v111
    %209 = vmatprep.subr.mxu0 0.0
    %210 = vmatpush2.msra.mxu0 0.0
    %211 = vmatprep.subr.mxu0 0.0
    %212 = vmatpush2.msra.mxu0 0.0
    %213 = vmatprep.subr.mxu0 0.0
    %214 = vmatpush2.msra.mxu0 0.0
    %215 = vmatprep.subr.mxu0 0.0
    %216 = vmatpush2.msra.mxu0 0.0
    %217 = vmatprep.subr.mxu0 0.0
    %218 = vmatpush2.msra.mxu0 0.0
    %219 = vmatprep.subr.mxu0 0.0
    %220 = vmatpush2.msra.mxu0 0.0
    %221 = vmatprep.subr.mxu0 0.0
    %222 = vmatpush2.msra.mxu0 0.0
    %223 = vmatprep.subr.mxu0 0.0
    %224 = vmatpush2.msra.mxu0 0.0
    %225 = vmatprep.subr.mxu0 0.0
    %226 = vmatpush2.msra.mxu0 0.0
    %227 = vmatprep.subr.mxu0 0.0
    %228 = vmatpush2.msra.mxu0 0.0
    %229 = vmatprep.subr.mxu0 0.0
    %230 = vmatpush2.msra.mxu0 0.0
    %231 = vmatprep.subr.mxu0 0.0
    %232 = vmatpush2.msra.mxu0 0.0
    %233 = vmatprep.subr.mxu0 0.0
    %234 = vmatpush2.msra.mxu0 0.0
    %235 = vmatprep.subr.mxu0 0.0
    %236 = vmatpush2.msra.mxu0 0.0
    %237 = vmatprep.subr.mxu0 0.0
    %238 = vmatpush2.msra.mxu0 0.0
    %239 = vmatprep.subr.mxu0 0.0
    %240 = vmatpush2.msra.mxu0 0.0
    %241 = vmatprep.mubr.f32.mxu0 0.0
    %242 = vmatmul.mubr.f32.gmra.mxu0 %v175
    %v243 = vpop.f32.mrf.mxu0
    %v244 = vadd.f32 0.0, %v243
    %v245 = vpop.f32.mrf.mxu0
    %246 = vdwg.mxu0
    %247 = vxpose.xlu0.b32.start [1/16] %v114, 128
    %248 = vxpose.xlu0.b32.cont [2/16] 0.0, 128
    %249 = vxpose.xlu0.b32.cont [3/16] 0.0, 128
    %250 = vxpose.xlu0.b32.cont [4/16] 0.0, 128
    %251 = vxpose.xlu0.b32.cont [5/16] 0.0, 128
    %252 = vxpose.xlu0.b32.cont [6/16] 0.0, 128
    %253 = vxpose.xlu0.b32.cont [7/16] 0.0, 128
    %254 = vxpose.xlu0.b32.cont [8/16] 0.0, 128
    %255 = vxpose.xlu0.b32.cont [9/16] 0.0, 128
    %256 = vxpose.xlu0.b32.cont [10/16] 0.0, 128
    %257 = vxpose.xlu0.b32.cont [11/16] 0.0, 128
    %258 = vxpose.xlu0.b32.cont [12/16] 0.0, 128
    %259 = vxpose.xlu0.b32.cont [13/16] 0.0, 128
    %260 = vxpose.xlu0.b32.cont [14/16] 0.0, 128
    %261 = vxpose.xlu0.b32.cont [15/16] 0.0, 128
    %262 = vxpose.xlu0.b32.end [16/16] 0.0, 128
    %v263 = vpop.trf.xlu0
    %v264 = vpop.trf.xlu0
    %v265 = vpop.trf.xlu0
    %v266 = vpop.trf.xlu0
    %v267 = vpop.trf.xlu0
    %v268 = vpop.trf.xlu0
    %v269 = vpop.trf.xlu0
    %v270 = vpop.trf.xlu0
    %v271 = vpop.trf.xlu0
    %v272 = vpop.trf.xlu0
    %v273 = vpop.trf.xlu0
    %v274 = vpop.trf.xlu0
    %v275 = vpop.trf.xlu0
    %v276 = vpop.trf.xlu0
    %v277 = vpop.trf.xlu0
    %v278 = vpop.trf.xlu0
    %v280 = vsel %vm173, %v263, 0
    %282 = vmatprep.subr.mxu0 0.0
    %283 = vmatpush1.msra.mxu0 0.0
    %284 = vmatprep.subr.mxu0 0.0
    %285 = vmatpush1.msra.mxu0 0.0
    %286 = vmatprep.subr.mxu0 0.0
    %287 = vmatpush1.msra.mxu0 0.0
    %288 = vmatprep.subr.mxu0 0.0
    %289 = vmatpush1.msra.mxu0 0.0
    %290 = vmatprep.subr.mxu0 0.0
    %291 = vmatpush1.msra.mxu0 0.0
    %292 = vmatprep.subr.mxu0 0.0
    %293 = vmatpush1.msra.mxu0 0.0
    %294 = vmatprep.subr.mxu0 0.0
    %295 = vmatpush1.msra.mxu0 0.0
    %296 = vmatprep.subr.mxu0 0.0
    %297 = vmatpush1.msra.mxu0 0.0
    %298 = vmatprep.subr.mxu0 0.0
    %299 = vmatpush1.msra.mxu0 0.0
    %300 = vmatprep.subr.mxu0 0.0
    %301 = vmatpush1.msra.mxu0 0.0
    %302 = vmatprep.subr.mxu0 0.0
    %303 = vmatpush1.msra.mxu0 0.0
    %304 = vmatprep.subr.mxu0 0.0
    %305 = vmatpush1.msra.mxu0 0.0
    %306 = vmatprep.subr.mxu0 0.0
    %307 = vmatpush1.msra.mxu0 0.0
    %308 = vmatprep.subr.mxu0 0.0
    %309 = vmatpush1.msra.mxu0 0.0
    %310 = vmatprep.subr.mxu0 0.0
    %311 = vmatpush1.msra.mxu0 0.0
    %312 = vmatprep.subr.mxu0 0.0
    %313 = vmatpush1.msra.mxu0 %v114
    %314 = vmatprep.subr.mxu0 0.0
    %315 = vmatpush2.msra.mxu0 0.0
    %316 = vmatprep.subr.mxu0 0.0
    %317 = vmatpush2.msra.mxu0 0.0
    %318 = vmatprep.subr.mxu0 0.0
    %319 = vmatpush2.msra.mxu0 0.0
    %320 = vmatprep.subr.mxu0 0.0
    %321 = vmatpush2.msra.mxu0 0.0
    %322 = vmatprep.subr.mxu0 0.0
    %323 = vmatpush2.msra.mxu0 0.0
    %324 = vmatprep.subr.mxu0 0.0
    %325 = vmatpush2.msra.mxu0 0.0
    %326 = vmatprep.subr.mxu0 0.0
    %327 = vmatpush2.msra.mxu0 0.0
    %328 = vmatprep.subr.mxu0 0.0
    %329 = vmatpush2.msra.mxu0 0.0
    %330 = vmatprep.subr.mxu0 0.0
    %331 = vmatpush2.msra.mxu0 0.0
    %332 = vmatprep.subr.mxu0 0.0
    %333 = vmatpush2.msra.mxu0 0.0
    %334 = vmatprep.subr.mxu0 0.0
    %335 = vmatpush2.msra.mxu0 0.0
    %336 = vmatprep.subr.mxu0 0.0
    %337 = vmatpush2.msra.mxu0 0.0
    %338 = vmatprep.subr.mxu0 0.0
    %339 = vmatpush2.msra.mxu0 0.0
    %340 = vmatprep.subr.mxu0 0.0
    %341 = vmatpush2.msra.mxu0 0.0
    %342 = vmatprep.subr.mxu0 0.0
    %343 = vmatpush2.msra.mxu0 0.0
    %344 = vmatprep.subr.mxu0 0.0
    %345 = vmatpush2.msra.mxu0 0.0
    %346 = vmatprep.mubr.f32.mxu0 0.0
    %347 = vmatmul.mubr.f32.gmra.mxu0 %v280
    %v348 = vpop.f32.mrf.mxu0
    %v349 = vadd.f32 0.0, %v348
    %v350 = vpop.f32.mrf.mxu0
    %351 = vdwg.mxu0
    %352 = vxpose.xlu0.b32.start [1/16] %v119, 128
    %353 = vxpose.xlu0.b32.cont [2/16] 0.0, 128
    %354 = vxpose.xlu0.b32.cont [3/16] 0.0, 128
    %355 = vxpose.xlu0.b32.cont [4/16] 0.0, 128
    %356 = vxpose.xlu0.b32.cont [5/16] 0.0, 128
    %357 = vxpose.xlu0.b32.cont [6/16] 0.0, 128
    %358 = vxpose.xlu0.b32.cont [7/16] 0.0, 128
    %359 = vxpose.xlu0.b32.cont [8/16] 0.0, 128
    %360 = vxpose.xlu0.b32.cont [9/16] 0.0, 128
    %361 = vxpose.xlu0.b32.cont [10/16] 0.0, 128
    %362 = vxpose.xlu0.b32.cont [11/16] 0.0, 128
    %363 = vxpose.xlu0.b32.cont [12/16] 0.0, 128
    %364 = vxpose.xlu0.b32.cont [13/16] 0.0, 128
    %365 = vxpose.xlu0.b32.cont [14/16] 0.0, 128
    %366 = vxpose.xlu0.b32.cont [15/16] 0.0, 128
    %367 = vxpose.xlu0.b32.end [16/16] 0.0, 128
    %v368 = vpop.trf.xlu0
    %v369 = vpop.trf.xlu0
    %v370 = vpop.trf.xlu0
    %v371 = vpop.trf.xlu0
    %v372 = vpop.trf.xlu0
    %v373 = vpop.trf.xlu0
    %v374 = vpop.trf.xlu0
    %v375 = vpop.trf.xlu0
    %v376 = vpop.trf.xlu0
    %v377 = vpop.trf.xlu0
    %v378 = vpop.trf.xlu0
    %v379 = vpop.trf.xlu0
    %v380 = vpop.trf.xlu0
    %v381 = vpop.trf.xlu0
    %v382 = vpop.trf.xlu0
    %v383 = vpop.trf.xlu0
    %v385 = vsel %vm173, %v368, 0
    %387 = vmatprep.subr.mxu0 0.0
    %388 = vmatpush1.msra.mxu0 0.0
    %389 = vmatprep.subr.mxu0 0.0
    %390 = vmatpush1.msra.mxu0 0.0
    %391 = vmatprep.subr.mxu0 0.0
    %392 = vmatpush1.msra.mxu0 0.0
    %393 = vmatprep.subr.mxu0 0.0
    %394 = vmatpush1.msra.mxu0 0.0
    %395 = vmatprep.subr.mxu0 0.0
    %396 = vmatpush1.msra.mxu0 0.0
    %397 = vmatprep.subr.mxu0 0.0
    %398 = vmatpush1.msra.mxu0 0.0
    %399 = vmatprep.subr.mxu0 0.0
    %400 = vmatpush1.msra.mxu0 0.0
    %401 = vmatprep.subr.mxu0 0.0
    %402 = vmatpush1.msra.mxu0 0.0
    %403 = vmatprep.subr.mxu0 0.0
    %404 = vmatpush1.msra.mxu0 0.0
    %405 = vmatprep.subr.mxu0 0.0
    %406 = vmatpush1.msra.mxu0 0.0
    %407 = vmatprep.subr.mxu0 0.0
    %408 = vmatpush1.msra.mxu0 0.0
    %409 = vmatprep.subr.mxu0 0.0
    %410 = vmatpush1.msra.mxu0 0.0
    %411 = vmatprep.subr.mxu0 0.0
    %412 = vmatpush1.msra.mxu0 0.0
    %413 = vmatprep.subr.mxu0 0.0
    %414 = vmatpush1.msra.mxu0 0.0
    %415 = vmatprep.subr.mxu0 0.0
    %416 = vmatpush1.msra.mxu0 0.0
    %417 = vmatprep.subr.mxu0 0.0
    %418 = vmatpush1.msra.mxu0 %v119
    %419 = vmatprep.subr.mxu0 0.0
    %420 = vmatpush2.msra.mxu0 0.0
    %421 = vmatprep.subr.mxu0 0.0
    %422 = vmatpush2.msra.mxu0 0.0
    %423 = vmatprep.subr.mxu0 0.0
    %424 = vmatpush2.msra.mxu0 0.0
    %425 = vmatprep.subr.mxu0 0.0
    %426 = vmatpush2.msra.mxu0 0.0
    %427 = vmatprep.subr.mxu0 0.0
    %428 = vmatpush2.msra.mxu0 0.0
    %429 = vmatprep.subr.mxu0 0.0
    %430 = vmatpush2.msra.mxu0 0.0
    %431 = vmatprep.subr.mxu0 0.0
    %432 = vmatpush2.msra.mxu0 0.0
    %433 = vmatprep.subr.mxu0 0.0
    %434 = vmatpush2.msra.mxu0 0.0
    %435 = vmatprep.subr.mxu0 0.0
    %436 = vmatpush2.msra.mxu0 0.0
    %437 = vmatprep.subr.mxu0 0.0
    %438 = vmatpush2.msra.mxu0 0.0
    %439 = vmatprep.subr.mxu0 0.0
    %440 = vmatpush2.msra.mxu0 0.0
    %441 = vmatprep.subr.mxu0 0.0
    %442 = vmatpush2.msra.mxu0 0.0
    %443 = vmatprep.subr.mxu0 0.0
    %444 = vmatpush2.msra.mxu0 0.0
    %445 = vmatprep.subr.mxu0 0.0
    %446 = vmatpush2.msra.mxu0 0.0
    %447 = vmatprep.subr.mxu0 0.0
    %448 = vmatpush2.msra.mxu0 0.0
    %449 = vmatprep.subr.mxu0 0.0
    %450 = vmatpush2.msra.mxu0 0.0
    %451 = vmatprep.mubr.f32.mxu0 0.0
    %452 = vmatmul.mubr.f32.gmra.mxu0 %v385
    %v453 = vpop.f32.mrf.mxu0
    %v454 = vadd.f32 0.0, %v453
    %v455 = vpop.f32.mrf.mxu0
    %456 = vdwg.mxu0
    %457 = vxpose.xlu0.b32.start [1/16] %v122, 128
    %458 = vxpose.xlu0.b32.cont [2/16] 0.0, 128
    %459 = vxpose.xlu0.b32.cont [3/16] 0.0, 128
    %460 = vxpose.xlu0.b32.cont [4/16] 0.0, 128
    %461 = vxpose.xlu0.b32.cont [5/16] 0.0, 128
    %462 = vxpose.xlu0.b32.cont [6/16] 0.0, 128
    %463 = vxpose.xlu0.b32.cont [7/16] 0.0, 128
    %464 = vxpose.xlu0.b32.cont [8/16] 0.0, 128
    %465 = vxpose.xlu0.b32.cont [9/16] 0.0, 128
    %466 = vxpose.xlu0.b32.cont [10/16] 0.0, 128
    %467 = vxpose.xlu0.b32.cont [11/16] 0.0, 128
    %468 = vxpose.xlu0.b32.cont [12/16] 0.0, 128
    %469 = vxpose.xlu0.b32.cont [13/16] 0.0, 128
    %470 = vxpose.xlu0.b32.cont [14/16] 0.0, 128
    %471 = vxpose.xlu0.b32.cont [15/16] 0.0, 128
    %472 = vxpose.xlu0.b32.end [16/16] 0.0, 128
    %v473 = vpop.trf.xlu0
    %v474 = vpop.trf.xlu0
    %v475 = vpop.trf.xlu0
    %v476 = vpop.trf.xlu0
    %v477 = vpop.trf.xlu0
    %v478 = vpop.trf.xlu0
    %v479 = vpop.trf.xlu0
    %v480 = vpop.trf.xlu0
    %v481 = vpop.trf.xlu0
    %v482 = vpop.trf.xlu0
    %v483 = vpop.trf.xlu0
    %v484 = vpop.trf.xlu0
    %v485 = vpop.trf.xlu0
    %v486 = vpop.trf.xlu0
    %v487 = vpop.trf.xlu0
    %v488 = vpop.trf.xlu0
    %v490 = vsel %vm173, %v473, 0
    %492 = vmatprep.subr.mxu0 0.0
    %493 = vmatpush1.msra.mxu0 0.0
    %494 = vmatprep.subr.mxu0 0.0
    %495 = vmatpush1.msra.mxu0 0.0
    %496 = vmatprep.subr.mxu0 0.0
    %497 = vmatpush1.msra.mxu0 0.0
    %498 = vmatprep.subr.mxu0 0.0
    %499 = vmatpush1.msra.mxu0 0.0
    %500 = vmatprep.subr.mxu0 0.0
    %501 = vmatpush1.msra.mxu0 0.0
    %502 = vmatprep.subr.mxu0 0.0
    %503 = vmatpush1.msra.mxu0 0.0
    %504 = vmatprep.subr.mxu0 0.0
    %505 = vmatpush1.msra.mxu0 0.0
    %506 = vmatprep.subr.mxu0 0.0
    %507 = vmatpush1.msra.mxu0 0.0
    %508 = vmatprep.subr.mxu0 0.0
    %509 = vmatpush1.msra.mxu0 0.0
    %510 = vmatprep.subr.mxu0 0.0
    %511 = vmatpush1.msra.mxu0 0.0
    %512 = vmatprep.subr.mxu0 0.0
    %513 = vmatpush1.msra.mxu0 0.0
    %514 = vmatprep.subr.mxu0 0.0
    %515 = vmatpush1.msra.mxu0 0.0
    %516 = vmatprep.subr.mxu0 0.0
    %517 = vmatpush1.msra.mxu0 0.0
    %518 = vmatprep.subr.mxu0 0.0
    %519 = vmatpush1.msra.mxu0 0.0
    %520 = vmatprep.subr.mxu0 0.0
    %521 = vmatpush1.msra.mxu0 0.0
    %522 = vmatprep.subr.mxu0 0.0
    %523 = vmatpush1.msra.mxu0 %v122
    %524 = vmatprep.subr.mxu0 0.0
    %525 = vmatpush2.msra.mxu0 0.0
    %526 = vmatprep.subr.mxu0 0.0
    %527 = vmatpush2.msra.mxu0 0.0
    %528 = vmatprep.subr.mxu0 0.0
    %529 = vmatpush2.msra.mxu0 0.0
    %530 = vmatprep.subr.mxu0 0.0
    %531 = vmatpush2.msra.mxu0 0.0
    %532 = vmatprep.subr.mxu0 0.0
    %533 = vmatpush2.msra.mxu0 0.0
    %534 = vmatprep.subr.mxu0 0.0
    %535 = vmatpush2.msra.mxu0 0.0
    %536 = vmatprep.subr.mxu0 0.0
    %537 = vmatpush2.msra.mxu0 0.0
    %538 = vmatprep.subr.mxu0 0.0
    %539 = vmatpush2.msra.mxu0 0.0
    %540 = vmatprep.subr.mxu0 0.0
    %541 = vmatpush2.msra.mxu0 0.0
    %542 = vmatprep.subr.mxu0 0.0
    %543 = vmatpush2.msra.mxu0 0.0
    %544 = vmatprep.subr.mxu0 0.0
    %545 = vmatpush2.msra.mxu0 0.0
    %546 = vmatprep.subr.mxu0 0.0
    %547 = vmatpush2.msra.mxu0 0.0
    %548 = vmatprep.subr.mxu0 0.0
    %549 = vmatpush2.msra.mxu0 0.0
    %550 = vmatprep.subr.mxu0 0.0
    %551 = vmatpush2.msra.mxu0 0.0
    %552 = vmatprep.subr.mxu0 0.0
    %553 = vmatpush2.msra.mxu0 0.0
    %554 = vmatprep.subr.mxu0 0.0
    %555 = vmatpush2.msra.mxu0 0.0
    %556 = vmatprep.mubr.f32.mxu0 0.0
    %557 = vmatmul.mubr.f32.gmra.mxu0 %v490
    %v558 = vpop.f32.mrf.mxu0
    %v559 = vadd.f32 0.0, %v558
    %v560 = vpop.f32.mrf.mxu0
    %561 = vdwg.mxu0
    %562 = vxpose.xlu0.b32.start [1/16] %v127, 128
    %563 = vxpose.xlu0.b32.cont [2/16] 0.0, 128
    %564 = vxpose.xlu0.b32.cont [3/16] 0.0, 128
    %565 = vxpose.xlu0.b32.cont [4/16] 0.0, 128
    %566 = vxpose.xlu0.b32.cont [5/16] 0.0, 128
    %567 = vxpose.xlu0.b32.cont [6/16] 0.0, 128
    %568 = vxpose.xlu0.b32.cont [7/16] 0.0, 128
    %569 = vxpose.xlu0.b32.cont [8/16] 0.0, 128
    %570 = vxpose.xlu0.b32.cont [9/16] 0.0, 128
    %571 = vxpose.xlu0.b32.cont [10/16] 0.0, 128
    %572 = vxpose.xlu0.b32.cont [11/16] 0.0, 128
    %573 = vxpose.xlu0.b32.cont [12/16] 0.0, 128
    %574 = vxpose.xlu0.b32.cont [13/16] 0.0, 128
    %575 = vxpose.xlu0.b32.cont [14/16] 0.0, 128
    %576 = vxpose.xlu0.b32.cont [15/16] 0.0, 128
    %577 = vxpose.xlu0.b32.end [16/16] 0.0, 128
    %v578 = vpop.trf.xlu0
    %v579 = vpop.trf.xlu0
    %v580 = vpop.trf.xlu0
    %v581 = vpop.trf.xlu0
    %v582 = vpop.trf.xlu0
    %v583 = vpop.trf.xlu0
    %v584 = vpop.trf.xlu0
    %v585 = vpop.trf.xlu0
    %v586 = vpop.trf.xlu0
    %v587 = vpop.trf.xlu0
    %v588 = vpop.trf.xlu0
    %v589 = vpop.trf.xlu0
    %v590 = vpop.trf.xlu0
    %v591 = vpop.trf.xlu0
    %v592 = vpop.trf.xlu0
    %v593 = vpop.trf.xlu0
    %v595 = vsel %vm173, %v578, 0
    %597 = vmatprep.subr.mxu0 0.0
    %598 = vmatpush1.msra.mxu0 0.0
    %599 = vmatprep.subr.mxu0 0.0
    %600 = vmatpush1.msra.mxu0 0.0
    %601 = vmatprep.subr.mxu0 0.0
    %602 = vmatpush1.msra.mxu0 0.0
    %603 = vmatprep.subr.mxu0 0.0
    %604 = vmatpush1.msra.mxu0 0.0
    %605 = vmatprep.subr.mxu0 0.0
    %606 = vmatpush1.msra.mxu0 0.0
    %607 = vmatprep.subr.mxu0 0.0
    %608 = vmatpush1.msra.mxu0 0.0
    %609 = vmatprep.subr.mxu0 0.0
    %610 = vmatpush1.msra.mxu0 0.0
    %611 = vmatprep.subr.mxu0 0.0
    %612 = vmatpush1.msra.mxu0 0.0
    %613 = vmatprep.subr.mxu0 0.0
    %614 = vmatpush1.msra.mxu0 0.0
    %615 = vmatprep.subr.mxu0 0.0
    %616 = vmatpush1.msra.mxu0 0.0
    %617 = vmatprep.subr.mxu0 0.0
    %618 = vmatpush1.msra.mxu0 0.0
    %619 = vmatprep.subr.mxu0 0.0
    %620 = vmatpush1.msra.mxu0 0.0
    %621 = vmatprep.subr.mxu0 0.0
    %622 = vmatpush1.msra.mxu0 0.0
    %623 = vmatprep.subr.mxu0 0.0
    %624 = vmatpush1.msra.mxu0 0.0
    %625 = vmatprep.subr.mxu0 0.0
    %626 = vmatpush1.msra.mxu0 0.0
    %627 = vmatprep.subr.mxu0 0.0
    %628 = vmatpush1.msra.mxu0 %v127
    %629 = vmatprep.subr.mxu0 0.0
    %630 = vmatpush2.msra.mxu0 0.0
    %631 = vmatprep.subr.mxu0 0.0
    %632 = vmatpush2.msra.mxu0 0.0
    %633 = vmatprep.subr.mxu0 0.0
    %634 = vmatpush2.msra.mxu0 0.0
    %635 = vmatprep.subr.mxu0 0.0
    %636 = vmatpush2.msra.mxu0 0.0
    %637 = vmatprep.subr.mxu0 0.0
    %638 = vmatpush2.msra.mxu0 0.0
    %639 = vmatprep.subr.mxu0 0.0
    %640 = vmatpush2.msra.mxu0 0.0
    %641 = vmatprep.subr.mxu0 0.0
    %642 = vmatpush2.msra.mxu0 0.0
    %643 = vmatprep.subr.mxu0 0.0
    %644 = vmatpush2.msra.mxu0 0.0
    %645 = vmatprep.subr.mxu0 0.0
    %646 = vmatpush2.msra.mxu0 0.0
    %647 = vmatprep.subr.mxu0 0.0
    %648 = vmatpush2.msra.mxu0 0.0
    %649 = vmatprep.subr.mxu0 0.0
    %650 = vmatpush2.msra.mxu0 0.0
    %651 = vmatprep.subr.mxu0 0.0
    %652 = vmatpush2.msra.mxu0 0.0
    %653 = vmatprep.subr.mxu0 0.0
    %654 = vmatpush2.msra.mxu0 0.0
    %655 = vmatprep.subr.mxu0 0.0
    %656 = vmatpush2.msra.mxu0 0.0
    %657 = vmatprep.subr.mxu0 0.0
    %658 = vmatpush2.msra.mxu0 0.0
    %659 = vmatprep.subr.mxu0 0.0
    %660 = vmatpush2.msra.mxu0 0.0
    %661 = vmatprep.mubr.f32.mxu0 0.0
    %662 = vmatmul.mubr.f32.gmra.mxu0 %v595
    %v663 = vpop.f32.mrf.mxu0
    %v664 = vadd.f32 0.0, %v663
    %v665 = vpop.f32.mrf.mxu0
    %666 = vdwg.mxu0
    %667 = vxpose.xlu0.b32.start [1/16] %v130, 128
    %668 = vxpose.xlu0.b32.cont [2/16] 0.0, 128
    %669 = vxpose.xlu0.b32.cont [3/16] 0.0, 128
    %670 = vxpose.xlu0.b32.cont [4/16] 0.0, 128
    %671 = vxpose.xlu0.b32.cont [5/16] 0.0, 128
    %672 = vxpose.xlu0.b32.cont [6/16] 0.0, 128
    %673 = vxpose.xlu0.b32.cont [7/16] 0.0, 128
    %674 = vxpose.xlu0.b32.cont [8/16] 0.0, 128
    %675 = vxpose.xlu0.b32.cont [9/16] 0.0, 128
    %676 = vxpose.xlu0.b32.cont [10/16] 0.0, 128
    %677 = vxpose.xlu0.b32.cont [11/16] 0.0, 128
    %678 = vxpose.xlu0.b32.cont [12/16] 0.0, 128
    %679 = vxpose.xlu0.b32.cont [13/16] 0.0, 128
    %680 = vxpose.xlu0.b32.cont [14/16] 0.0, 128
    %681 = vxpose.xlu0.b32.cont [15/16] 0.0, 128
    %682 = vxpose.xlu0.b32.end [16/16] 0.0, 128
    %v683 = vpop.trf.xlu0
    %v684 = vpop.trf.xlu0
    %v685 = vpop.trf.xlu0
    %v686 = vpop.trf.xlu0
    %v687 = vpop.trf.xlu0
    %v688 = vpop.trf.xlu0
    %v689 = vpop.trf.xlu0
    %v690 = vpop.trf.xlu0
    %v691 = vpop.trf.xlu0
    %v692 = vpop.trf.xlu0
    %v693 = vpop.trf.xlu0
    %v694 = vpop.trf.xlu0
    %v695 = vpop.trf.xlu0
    %v696 = vpop.trf.xlu0
    %v697 = vpop.trf.xlu0
    %v698 = vpop.trf.xlu0
    %v700 = vsel %vm173, %v683, 0
    %702 = vmatprep.subr.mxu0 0.0
    %703 = vmatpush1.msra.mxu0 0.0
    %704 = vmatprep.subr.mxu0 0.0
    %705 = vmatpush1.msra.mxu0 0.0
    %706 = vmatprep.subr.mxu0 0.0
    %707 = vmatpush1.msra.mxu0 0.0
    %708 = vmatprep.subr.mxu0 0.0
    %709 = vmatpush1.msra.mxu0 0.0
    %710 = vmatprep.subr.mxu0 0.0
    %711 = vmatpush1.msra.mxu0 0.0
    %712 = vmatprep.subr.mxu0 0.0
    %713 = vmatpush1.msra.mxu0 0.0
    %714 = vmatprep.subr.mxu0 0.0
    %715 = vmatpush1.msra.mxu0 0.0
    %716 = vmatprep.subr.mxu0 0.0
    %717 = vmatpush1.msra.mxu0 0.0
    %718 = vmatprep.subr.mxu0 0.0
    %719 = vmatpush1.msra.mxu0 0.0
    %720 = vmatprep.subr.mxu0 0.0
    %721 = vmatpush1.msra.mxu0 0.0
    %722 = vmatprep.subr.mxu0 0.0
    %723 = vmatpush1.msra.mxu0 0.0
    %724 = vmatprep.subr.mxu0 0.0
    %725 = vmatpush1.msra.mxu0 0.0
    %726 = vmatprep.subr.mxu0 0.0
    %727 = vmatpush1.msra.mxu0 0.0
    %728 = vmatprep.subr.mxu0 0.0
    %729 = vmatpush1.msra.mxu0 0.0
    %730 = vmatprep.subr.mxu0 0.0
    %731 = vmatpush1.msra.mxu0 0.0
    %732 = vmatprep.subr.mxu0 0.0
    %733 = vmatpush1.msra.mxu0 %v130
    %734 = vmatprep.subr.mxu0 0.0
    %735 = vmatpush2.msra.mxu0 0.0
    %736 = vmatprep.subr.mxu0 0.0
    %737 = vmatpush2.msra.mxu0 0.0
    %738 = vmatprep.subr.mxu0 0.0
    %739 = vmatpush2.msra.mxu0 0.0
    %740 = vmatprep.subr.mxu0 0.0
    %741 = vmatpush2.msra.mxu0 0.0
    %742 = vmatprep.subr.mxu0 0.0
    %743 = vmatpush2.msra.mxu0 0.0
    %744 = vmatprep.subr.mxu0 0.0
    %745 = vmatpush2.msra.mxu0 0.0
    %746 = vmatprep.subr.mxu0 0.0
    %747 = vmatpush2.msra.mxu0 0.0
    %748 = vmatprep.subr.mxu0 0.0
    %749 = vmatpush2.msra.mxu0 0.0
    %750 = vmatprep.subr.mxu0 0.0
    %751 = vmatpush2.msra.mxu0 0.0
    %752 = vmatprep.subr.mxu0 0.0
    %753 = vmatpush2.msra.mxu0 0.0
    %754 = vmatprep.subr.mxu0 0.0
    %755 = vmatpush2.msra.mxu0 0.0
    %756 = vmatprep.subr.mxu0 0.0
    %757 = vmatpush2.msra.mxu0 0.0
    %758 = vmatprep.subr.mxu0 0.0
    %759 = vmatpush2.msra.mxu0 0.0
    %760 = vmatprep.subr.mxu0 0.0
    %761 = vmatpush2.msra.mxu0 0.0
    %762 = vmatprep.subr.mxu0 0.0
    %763 = vmatpush2.msra.mxu0 0.0
    %764 = vmatprep.subr.mxu0 0.0
    %765 = vmatpush2.msra.mxu0 0.0
    %766 = vmatprep.mubr.f32.mxu0 0.0
    %767 = vmatmul.mubr.f32.gmra.mxu0 %v700
    %v768 = vpop.f32.mrf.mxu0
    %v769 = vadd.f32 0.0, %v768
    %v770 = vpop.f32.mrf.mxu0
    %771 = vdwg.mxu0
    %772 = vxpose.xlu0.b32.start [1/16] %v135, 128
    %773 = vxpose.xlu0.b32.cont [2/16] 0.0, 128
    %774 = vxpose.xlu0.b32.cont [3/16] 0.0, 128
    %775 = vxpose.xlu0.b32.cont [4/16] 0.0, 128
    %776 = vxpose.xlu0.b32.cont [5/16] 0.0, 128
    %777 = vxpose.xlu0.b32.cont [6/16] 0.0, 128
    %778 = vxpose.xlu0.b32.cont [7/16] 0.0, 128
    %779 = vxpose.xlu0.b32.cont [8/16] 0.0, 128
    %780 = vxpose.xlu0.b32.cont [9/16] 0.0, 128
    %781 = vxpose.xlu0.b32.cont [10/16] 0.0, 128
    %782 = vxpose.xlu0.b32.cont [11/16] 0.0, 128
    %783 = vxpose.xlu0.b32.cont [12/16] 0.0, 128
    %784 = vxpose.xlu0.b32.cont [13/16] 0.0, 128
    %785 = vxpose.xlu0.b32.cont [14/16] 0.0, 128
    %786 = vxpose.xlu0.b32.cont [15/16] 0.0, 128
    %787 = vxpose.xlu0.b32.end [16/16] 0.0, 128
    %v788 = vpop.trf.xlu0
    %v789 = vpop.trf.xlu0
    %v790 = vpop.trf.xlu0
    %v791 = vpop.trf.xlu0
    %v792 = vpop.trf.xlu0
    %v793 = vpop.trf.xlu0
    %v794 = vpop.trf.xlu0
    %v795 = vpop.trf.xlu0
    %v796 = vpop.trf.xlu0
    %v797 = vpop.trf.xlu0
    %v798 = vpop.trf.xlu0
    %v799 = vpop.trf.xlu0
    %v800 = vpop.trf.xlu0
    %v801 = vpop.trf.xlu0
    %v802 = vpop.trf.xlu0
    %v803 = vpop.trf.xlu0
    %v805 = vsel %vm173, %v788, 0
    %807 = vmatprep.subr.mxu0 0.0
    %808 = vmatpush1.msra.mxu0 0.0
    %809 = vmatprep.subr.mxu0 0.0
    %810 = vmatpush1.msra.mxu0 0.0
    %811 = vmatprep.subr.mxu0 0.0
    %812 = vmatpush1.msra.mxu0 0.0
    %813 = vmatprep.subr.mxu0 0.0
    %814 = vmatpush1.msra.mxu0 0.0
    %815 = vmatprep.subr.mxu0 0.0
    %816 = vmatpush1.msra.mxu0 0.0
    %817 = vmatprep.subr.mxu0 0.0
    %818 = vmatpush1.msra.mxu0 0.0
    %819 = vmatprep.subr.mxu0 0.0
    %820 = vmatpush1.msra.mxu0 0.0
    %821 = vmatprep.subr.mxu0 0.0
    %822 = vmatpush1.msra.mxu0 0.0
    %823 = vmatprep.subr.mxu0 0.0
    %824 = vmatpush1.msra.mxu0 0.0
    %825 = vmatprep.subr.mxu0 0.0
    %826 = vmatpush1.msra.mxu0 0.0
    %827 = vmatprep.subr.mxu0 0.0
    %828 = vmatpush1.msra.mxu0 0.0
    %829 = vmatprep.subr.mxu0 0.0
    %830 = vmatpush1.msra.mxu0 0.0
    %831 = vmatprep.subr.mxu0 0.0
    %832 = vmatpush1.msra.mxu0 0.0
    %833 = vmatprep.subr.mxu0 0.0
    %834 = vmatpush1.msra.mxu0 0.0
    %835 = vmatprep.subr.mxu0 0.0
    %836 = vmatpush1.msra.mxu0 0.0
    %837 = vmatprep.subr.mxu0 0.0
    %838 = vmatpush1.msra.mxu0 %v135
    %839 = vmatprep.subr.mxu0 0.0
    %840 = vmatpush2.msra.mxu0 0.0
    %841 = vmatprep.subr.mxu0 0.0
    %842 = vmatpush2.msra.mxu0 0.0
    %843 = vmatprep.subr.mxu0 0.0
    %844 = vmatpush2.msra.mxu0 0.0
    %845 = vmatprep.subr.mxu0 0.0
    %846 = vmatpush2.msra.mxu0 0.0
    %847 = vmatprep.subr.mxu0 0.0
    %848 = vmatpush2.msra.mxu0 0.0
    %849 = vmatprep.subr.mxu0 0.0
    %850 = vmatpush2.msra.mxu0 0.0
    %851 = vmatprep.subr.mxu0 0.0
    %852 = vmatpush2.msra.mxu0 0.0
    %853 = vmatprep.subr.mxu0 0.0
    %854 = vmatpush2.msra.mxu0 0.0
    %855 = vmatprep.subr.mxu0 0.0
    %856 = vmatpush2.msra.mxu0 0.0
    %857 = vmatprep.subr.mxu0 0.0
    %858 = vmatpush2.msra.mxu0 0.0
    %859 = vmatprep.subr.mxu0 0.0
    %860 = vmatpush2.msra.mxu0 0.0
    %861 = vmatprep.subr.mxu0 0.0
    %862 = vmatpush2.msra.mxu0 0.0
    %863 = vmatprep.subr.mxu0 0.0
    %864 = vmatpush2.msra.mxu0 0.0
    %865 = vmatprep.subr.mxu0 0.0
    %866 = vmatpush2.msra.mxu0 0.0
    %867 = vmatprep.subr.mxu0 0.0
    %868 = vmatpush2.msra.mxu0 0.0
    %869 = vmatprep.subr.mxu0 0.0
    %870 = vmatpush2.msra.mxu0 0.0
    %871 = vmatprep.mubr.f32.mxu0 0.0
    %872 = vmatmul.mubr.f32.gmra.mxu0 %v805
    %v873 = vpop.f32.mrf.mxu0
    %v874 = vadd.f32 0.0, %v873
    %v875 = vpop.f32.mrf.mxu0
    %876 = vdwg.mxu0
    %877 = vxpose.xlu0.b32.start [1/16] %v138, 128
    %878 = vxpose.xlu0.b32.cont [2/16] 0.0, 128
    %879 = vxpose.xlu0.b32.cont [3/16] 0.0, 128
    %880 = vxpose.xlu0.b32.cont [4/16] 0.0, 128
    %881 = vxpose.xlu0.b32.cont [5/16] 0.0, 128
    %882 = vxpose.xlu0.b32.cont [6/16] 0.0, 128
    %883 = vxpose.xlu0.b32.cont [7/16] 0.0, 128
    %884 = vxpose.xlu0.b32.cont [8/16] 0.0, 128
    %885 = vxpose.xlu0.b32.cont [9/16] 0.0, 128
    %886 = vxpose.xlu0.b32.cont [10/16] 0.0, 128
    %887 = vxpose.xlu0.b32.cont [11/16] 0.0, 128
    %888 = vxpose.xlu0.b32.cont [12/16] 0.0, 128
    %889 = vxpose.xlu0.b32.cont [13/16] 0.0, 128
    %890 = vxpose.xlu0.b32.cont [14/16] 0.0, 128
    %891 = vxpose.xlu0.b32.cont [15/16] 0.0, 128
    %892 = vxpose.xlu0.b32.end [16/16] 0.0, 128
    %v893 = vpop.trf.xlu0
    %v894 = vpop.trf.xlu0
    %v895 = vpop.trf.xlu0
    %v896 = vpop.trf.xlu0
    %v897 = vpop.trf.xlu0
    %v898 = vpop.trf.xlu0
    %v899 = vpop.trf.xlu0
    %v900 = vpop.trf.xlu0
    %v901 = vpop.trf.xlu0
    %v902 = vpop.trf.xlu0
    %v903 = vpop.trf.xlu0
    %v904 = vpop.trf.xlu0
    %v905 = vpop.trf.xlu0
    %v906 = vpop.trf.xlu0
    %v907 = vpop.trf.xlu0
    %v908 = vpop.trf.xlu0
    %v910 = vsel %vm173, %v893, 0
    %912 = vmatprep.subr.mxu0 0.0
    %913 = vmatpush1.msra.mxu0 0.0
    %914 = vmatprep.subr.mxu0 0.0
    %915 = vmatpush1.msra.mxu0 0.0
    %916 = vmatprep.subr.mxu0 0.0
    %917 = vmatpush1.msra.mxu0 0.0
    %918 = vmatprep.subr.mxu0 0.0
    %919 = vmatpush1.msra.mxu0 0.0
    %920 = vmatprep.subr.mxu0 0.0
    %921 = vmatpush1.msra.mxu0 0.0
    %922 = vmatprep.subr.mxu0 0.0
    %923 = vmatpush1.msra.mxu0 0.0
    %924 = vmatprep.subr.mxu0 0.0
    %925 = vmatpush1.msra.mxu0 0.0
    %926 = vmatprep.subr.mxu0 0.0
    %927 = vmatpush1.msra.mxu0 0.0
    %928 = vmatprep.subr.mxu0 0.0
    %929 = vmatpush1.msra.mxu0 0.0
    %930 = vmatprep.subr.mxu0 0.0
    %931 = vmatpush1.msra.mxu0 0.0
    %932 = vmatprep.subr.mxu0 0.0
    %933 = vmatpush1.msra.mxu0 0.0
    %934 = vmatprep.subr.mxu0 0.0
    %935 = vmatpush1.msra.mxu0 0.0
    %936 = vmatprep.subr.mxu0 0.0
    %937 = vmatpush1.msra.mxu0 0.0
    %938 = vmatprep.subr.mxu0 0.0
    %939 = vmatpush1.msra.mxu0 0.0
    %940 = vmatprep.subr.mxu0 0.0
    %941 = vmatpush1.msra.mxu0 0.0
    %942 = vmatprep.subr.mxu0 0.0
    %943 = vmatpush1.msra.mxu0 %v138
    %944 = vmatprep.subr.mxu0 0.0
    %945 = vmatpush2.msra.mxu0 0.0
    %946 = vmatprep.subr.mxu0 0.0
    %947 = vmatpush2.msra.mxu0 0.0
    %948 = vmatprep.subr.mxu0 0.0
    %949 = vmatpush2.msra.mxu0 0.0
    %950 = vmatprep.subr.mxu0 0.0
    %951 = vmatpush2.msra.mxu0 0.0
    %952 = vmatprep.subr.mxu0 0.0
    %953 = vmatpush2.msra.mxu0 0.0
    %954 = vmatprep.subr.mxu0 0.0
    %955 = vmatpush2.msra.mxu0 0.0
    %956 = vmatprep.subr.mxu0 0.0
    %957 = vmatpush2.msra.mxu0 0.0
    %958 = vmatprep.subr.mxu0 0.0
    %959 = vmatpush2.msra.mxu0 0.0
    %960 = vmatprep.subr.mxu0 0.0
    %961 = vmatpush2.msra.mxu0 0.0
    %962 = vmatprep.subr.mxu0 0.0
    %963 = vmatpush2.msra.mxu0 0.0
    %964 = vmatprep.subr.mxu0 0.0
    %965 = vmatpush2.msra.mxu0 0.0
    %966 = vmatprep.subr.mxu0 0.0
    %967 = vmatpush2.msra.mxu0 0.0
    %968 = vmatprep.subr.mxu0 0.0
    %969 = vmatpush2.msra.mxu0 0.0
    %970 = vmatprep.subr.mxu0 0.0
    %971 = vmatpush2.msra.mxu0 0.0
    %972 = vmatprep.subr.mxu0 0.0
    %973 = vmatpush2.msra.mxu0 0.0
    %974 = vmatprep.subr.mxu0 0.0
    %975 = vmatpush2.msra.mxu0 0.0
    %976 = vmatprep.mubr.f32.mxu0 0.0
    %977 = vmatmul.mubr.f32.gmra.mxu0 %v910
    %v978 = vpop.f32.mrf.mxu0
    %v979 = vadd.f32 0.0, %v978
    %v980 = vpop.f32.mrf.mxu0
    %981 = vdwg.mxu0
    %v982 = vld [vmem:[%s3] sm:$0x1]
    %v983 = vld [vmem:[%s3 + $0x1] sm:$0x1]
    %v984 = vld [vmem:[%s3 + $0x2] sm:$0x1]
    %v985 = vld [vmem:[%s3 + $0x3] sm:$0x1]
    %v986 = vld [vmem:[%s3 + $0x4] sm:$0x1]
    %v987 = vld [vmem:[%s3 + $0x5] sm:$0x1]
    %v988 = vld [vmem:[%s3 + $0x6] sm:$0x1]
    %v989 = vld [vmem:[%s3 + $0x7] sm:$0x1]
    %v990 = vld [vmem:[%s4] sm:$0xff]
    %s991 = scalar_lea.vmem %s4, 8
    %v992 = vld [vmem:[%s991] sm:$0xff]
    %s993 = scalar_lea.vmem %s4, 16
    %v994 = vld [vmem:[%s993] sm:$0xff]
    %v995 = vmul.f32 %v994, 0.33333334
    %v996 = vsel 1, %v990, %v992
    %v997 = vsel 0, %v990, %v992
    %v998 = vld [vmem:[#allocation2] sm:$0xff]
    %v999 = vld [vmem:[#allocation2 + $0x8] sm:$0xff]
    %v1000 = vld [vmem:[#allocation2 + $0x10] sm:$0xff]
    %v1001 = vld [vmem:[#allocation2 + $0x18] sm:$0xff]
    %v1002 = vld [vmem:[#allocation2 + $0x20] sm:$0xff]
    %v1003 = vld [vmem:[#allocation2 + $0x28] sm:$0xff]
    %v1004 = vld [vmem:[#allocation2 + $0x30] sm:$0xff]
    %v1005 = vld [vmem:[#allocation2 + $0x38] sm:$0xff]
    %v1006 = vmax.f32 %v998, 1e-06
    %v1007 = vmax.f32 %v999, 1e-06
    %v1008 = vmax.f32 %v1000, 1e-06
    %v1009 = vmax.f32 %v1001, 1e-06
    %v1010 = vmax.f32 %v1002, 1e-06
    %v1011 = vmax.f32 %v1003, 1e-06
    %v1012 = vmax.f32 %v1004, 1e-06
    %v1013 = vmax.f32 %v1005, 1e-06
    %v1014 = vmin.f32 %v1006, 0.999999
    %v1015 = vmin.f32 %v1007, 0.999999
    %v1016 = vmin.f32 %v1008, 0.999999
    %v1017 = vmin.f32 %v1009, 0.999999
    %v1018 = vmin.f32 %v1010, 0.999999
    %v1019 = vmin.f32 %v1011, 0.999999
    %v1020 = vmin.f32 %v1012, 0.999999
    %v1021 = vmin.f32 %v1013, 0.999999
    %v1022 = vlog2.pop %v1014
    %v1023 = vmul.f32 %v1022, 0.6931472
    %v1024 = vlog2.pop %v1015
    %v1025 = vmul.f32 %v1024, 0.6931472
    %v1026 = vlog2.pop %v1016
    %v1027 = vmul.f32 %v1026, 0.6931472
    %v1028 = vlog2.pop %v1017
    %v1029 = vmul.f32 %v1028, 0.6931472
    %v1030 = vlog2.pop %v1018
    %v1031 = vmul.f32 %v1030, 0.6931472
    %v1032 = vlog2.pop %v1019
    %v1033 = vmul.f32 %v1032, 0.6931472
    %v1034 = vlog2.pop %v1020
    %v1035 = vmul.f32 %v1034, 0.6931472
    %v1036 = vlog2.pop %v1021
    %v1037 = vmul.f32 %v1036, 0.6931472
    %v1038 = vsub.f32 1.0, %v1014
    %v1039 = vsub.f32 1.0, %v1015
    %v1040 = vsub.f32 1.0, %v1016
    %v1041 = vsub.f32 1.0, %v1017
    %v1042 = vsub.f32 1.0, %v1018
    %v1043 = vsub.f32 1.0, %v1019
    %v1044 = vsub.f32 1.0, %v1020
    %v1045 = vsub.f32 1.0, %v1021
    %v1046 = vlog2.pop %v1038
    %v1047 = vmul.f32 %v1046, 0.6931472
    %v1048 = vlog2.pop %v1039
    %v1049 = vmul.f32 %v1048, 0.6931472
    %v1050 = vlog2.pop %v1040
    %v1051 = vmul.f32 %v1050, 0.6931472
    %v1052 = vlog2.pop %v1041
    %v1053 = vmul.f32 %v1052, 0.6931472
    %v1054 = vlog2.pop %v1042
    %v1055 = vmul.f32 %v1054, 0.6931472
    %v1056 = vlog2.pop %v1043
    %v1057 = vmul.f32 %v1056, 0.6931472
    %v1058 = vlog2.pop %v1044
    %v1059 = vmul.f32 %v1058, 0.6931472
    %v1060 = vlog2.pop %v1045
    %v1061 = vmul.f32 %v1060, 0.6931472
    %v1062 = vsub.f32 %v1023, %v1047
    %v1063 = vsub.f32 %v1025, %v1049
    %v1064 = vsub.f32 %v1027, %v1051
    %v1065 = vsub.f32 %v1029, %v1053
    %v1066 = vsub.f32 %v1031, %v1055
    %v1067 = vsub.f32 %v1033, %v1057
    %v1068 = vsub.f32 %v1035, %v1059
    %v1069 = vsub.f32 %v1037, %v1061
    %v1078 = vlaneseq
    %v1079 = vshrl.u32 %v1078, 7
    %v1080 = vsub.s32 0, %v1079
    %v1081 = vrot.slane %v982, %v1080
    %v1082 = vlaneseq
    %v1083 = vshrl.u32 %v1082, 7
    %v1084 = vsub.s32 0, %v1083
    %v1085 = vrot.slane %v983, %v1084
    %v1086 = vlaneseq
    %v1087 = vshrl.u32 %v1086, 7
    %v1088 = vsub.s32 0, %v1087
    %v1089 = vrot.slane %v984, %v1088
    %v1090 = vlaneseq
    %v1091 = vshrl.u32 %v1090, 7
    %v1092 = vsub.s32 0, %v1091
    %v1093 = vrot.slane %v985, %v1092
    %v1094 = vlaneseq
    %v1095 = vshrl.u32 %v1094, 7
    %v1096 = vsub.s32 0, %v1095
    %v1097 = vrot.slane %v986, %v1096
    %v1098 = vlaneseq
    %v1099 = vshrl.u32 %v1098, 7
    %v1100 = vsub.s32 0, %v1099
    %v1101 = vrot.slane %v987, %v1100
    %v1102 = vlaneseq
    %v1103 = vshrl.u32 %v1102, 7
    %v1104 = vsub.s32 0, %v1103
    %v1105 = vrot.slane %v988, %v1104
    %v1106 = vlaneseq
    %v1107 = vshrl.u32 %v1106, 7
    %v1108 = vsub.s32 0, %v1107
    %v1109 = vrot.slane %v989, %v1108
    %1110 = vset.pattern.permute.xlu0 0
    %1111 = vperm.xlu0 %1110, %v1081
    %v1112 = vpop.permute.xlu0 %1111
    %1114 = vset.pattern.permute.xlu0 0
    %1115 = vperm.xlu0 %1114, %v1085
    %v1116 = vpop.permute.xlu0 %1115
    %1118 = vset.pattern.permute.xlu0 0
    %1119 = vperm.xlu0 %1118, %v1089
    %v1120 = vpop.permute.xlu0 %1119
    %1122 = vset.pattern.permute.xlu0 0
    %1123 = vperm.xlu0 %1122, %v1093
    %v1124 = vpop.permute.xlu0 %1123
    %1126 = vset.pattern.permute.xlu0 0
    %1127 = vperm.xlu0 %1126, %v1097
    %v1128 = vpop.permute.xlu0 %1127
    %1130 = vset.pattern.permute.xlu0 0
    %1131 = vperm.xlu0 %1130, %v1101
    %v1132 = vpop.permute.xlu0 %1131
    %1134 = vset.pattern.permute.xlu0 0
    %1135 = vperm.xlu0 %1134, %v1105
    %v1136 = vpop.permute.xlu0 %1135
    %1138 = vset.pattern.permute.xlu0 0
    %1139 = vperm.xlu0 %1138, %v1109
    %v1140 = vpop.permute.xlu0 %1139
    %v1142 = vmul.f32 %v996, %v1112
    %v1143 = vmul.f32 %v997, %v1116
    %v1144 = vmul.f32 %v997, %v1120
    %v1145 = vmul.f32 %v997, %v1124
    %v1146 = vmul.f32 %v997, %v1128
    %v1147 = vmul.f32 %v997, %v1132
    %v1148 = vmul.f32 %v997, %v1136
    %v1149 = vmul.f32 %v997, %v1140
    %v1150 = vadd.f32 %v1062, %v1142
    %v1151 = vadd.f32 %v1063, %v1143
    %v1152 = vadd.f32 %v1064, %v1144
    %v1153 = vadd.f32 %v1065, %v1145
    %v1154 = vadd.f32 %v1066, %v1146
    %v1155 = vadd.f32 %v1067, %v1147
    %v1156 = vadd.f32 %v1068, %v1148
    %v1157 = vadd.f32 %v1069, %v1149
    %v1158 = vmul.f32 %v1150, 1.5
    %v1159 = vmul.f32 %v1151, 1.5
    %v1160 = vmul.f32 %v1152, 1.5
    %v1161 = vmul.f32 %v1153, 1.5
    %v1162 = vmul.f32 %v1154, 1.5
    %v1163 = vmul.f32 %v1155, 1.5
    %v1164 = vmul.f32 %v1156, 1.5
    %v1165 = vmul.f32 %v1157, 1.5
    %v1166 = vxor.u32 %v1158, 2147483648
    %v1167 = vxor.u32 %v1159, 2147483648
    %v1168 = vxor.u32 %v1160, 2147483648
    %v1169 = vxor.u32 %v1161, 2147483648
    %v1170 = vxor.u32 %v1162, 2147483648
    %v1171 = vxor.u32 %v1163, 2147483648
    %v1172 = vxor.u32 %v1164, 2147483648
    %v1173 = vxor.u32 %v1165, 2147483648
    %v1174 = vmul.f32 %v1166, 1.442695
    %v1175 = vpow.pop %v1174
    %v1176 = vmul.f32 %v1167, 1.442695
    %v1177 = vpow.pop %v1176
    %v1178 = vmul.f32 %v1168, 1.442695
    %v1179 = vpow.pop %v1178
    %v1180 = vmul.f32 %v1169, 1.442695
    %v1181 = vpow.pop %v1180
    %v1182 = vmul.f32 %v1170, 1.442695
    %v1183 = vpow.pop %v1182
    %v1184 = vmul.f32 %v1171, 1.442695
    %v1185 = vpow.pop %v1184
    %v1186 = vmul.f32 %v1172, 1.442695
    %v1187 = vpow.pop %v1186
    %v1188 = vmul.f32 %v1173, 1.442695
    %v1189 = vpow.pop %v1188
    %v1190 = vadd.f32 %v1175, 1.0
    %v1191 = vadd.f32 %v1177, 1.0
    %v1192 = vadd.f32 %v1179, 1.0
    %v1193 = vadd.f32 %v1181, 1.0
    %v1194 = vadd.f32 %v1183, 1.0
    %v1195 = vadd.f32 %v1185, 1.0
    %v1196 = vadd.f32 %v1187, 1.0
    %v1197 = vadd.f32 %v1189, 1.0
    %v1198 = vrcp.pop %v1190
    %v1199 = vmul.f32 1.0, %v1198
    %v1200 = vrcp.pop %v1191
    %v1201 = vmul.f32 1.0, %v1200
    %v1202 = vrcp.pop %v1192
    %v1203 = vmul.f32 1.0, %v1202
    %v1204 = vrcp.pop %v1193
    %v1205 = vmul.f32 1.0, %v1204
    %v1206 = vrcp.pop %v1194
    %v1207 = vmul.f32 1.0, %v1206
    %v1208 = vrcp.pop %v1195
    %v1209 = vmul.f32 1.0, %v1208
    %v1210 = vrcp.pop %v1196
    %v1211 = vmul.f32 1.0, %v1210
    %v1212 = vrcp.pop %v1197
    %v1213 = vmul.f32 1.0, %v1212
    %v1214 = vmul.f32 %v1199, 1.2
    %v1215 = vmul.f32 %v1201, 1.2
    %v1216 = vmul.f32 %v1203, 1.2
    %v1217 = vmul.f32 %v1205, 1.2
    %v1218 = vmul.f32 %v1207, 1.2
    %v1219 = vmul.f32 %v1209, 1.2
    %v1220 = vmul.f32 %v1211, 1.2
    %v1221 = vmul.f32 %v1213, 1.2
    %v1222 = vadd.f32 %v1214, -0.1
    %v1223 = vadd.f32 %v1215, -0.1
    %v1224 = vadd.f32 %v1216, -0.1
    %v1225 = vadd.f32 %v1217, -0.1
    %v1226 = vadd.f32 %v1218, -0.1
    %v1227 = vadd.f32 %v1219, -0.1
    %v1228 = vadd.f32 %v1220, -0.1
    %v1229 = vadd.f32 %v1221, -0.1
    %v1230 = vmax.f32 %v1222, 0.0
    %v1231 = vmax.f32 %v1223, 0.0
    %v1232 = vmax.f32 %v1224, 0.0
    %v1233 = vmax.f32 %v1225, 0.0
    %v1234 = vmax.f32 %v1226, 0.0
    %v1235 = vmax.f32 %v1227, 0.0
    %v1236 = vmax.f32 %v1228, 0.0
    %v1237 = vmax.f32 %v1229, 0.0
    %v1238 = vmin.f32 %v1230, 1.0
    %v1239 = vmin.f32 %v1231, 1.0
    %v1240 = vmin.f32 %v1232, 1.0
    %v1241 = vmin.f32 %v1233, 1.0
    %v1242 = vmin.f32 %v1234, 1.0
    %v1243 = vmin.f32 %v1235, 1.0
    %v1244 = vmin.f32 %v1236, 1.0
    %v1245 = vmin.f32 %v1237, 1.0
    %v1246 = vmul.f32 %v1238, 0.33333334
    %v1247 = vmul.f32 %v1239, 0.33333334
    %v1248 = vmul.f32 %v1240, 0.33333334
    %v1249 = vmul.f32 %v1241, 0.33333334
    %v1250 = vmul.f32 %v1242, 0.33333334
    %v1251 = vmul.f32 %v1243, 0.33333334
    %v1252 = vmul.f32 %v1244, 0.33333334
    %v1253 = vmul.f32 %v1245, 0.33333334
    %v1254 = vadd.f32 %v1246, %v995
    %v1255 = vadd.f32 %v1247, %v995
    %v1256 = vadd.f32 %v1248, %v995
    %v1257 = vadd.f32 %v1249, %v995
    %v1258 = vadd.f32 %v1250, %v995
    %v1259 = vadd.f32 %v1251, %v995
    %v1260 = vadd.f32 %v1252, %v995
    %v1261 = vadd.f32 %v1253, %v995
    %v1262 = vmul.f32 %v244, %v1112
    %v1263 = vmul.f32 %v349, %v1116
    %v1264 = vmul.f32 %v454, %v1120
    %v1265 = vmul.f32 %v559, %v1124
    %v1266 = vmul.f32 %v664, %v1128
    %v1267 = vmul.f32 %v769, %v1132
    %v1268 = vmul.f32 %v874, %v1136
    %v1269 = vmul.f32 %v979, %v1140
    %v1270 = vxor.u32 %v1262, 2147483648
    %v1271 = vxor.u32 %v1263, 2147483648
    %v1272 = vxor.u32 %v1264, 2147483648
    %v1273 = vxor.u32 %v1265, 2147483648
    %v1274 = vxor.u32 %v1266, 2147483648
    %v1275 = vxor.u32 %v1267, 2147483648
    %v1276 = vxor.u32 %v1268, 2147483648
    %v1277 = vxor.u32 %v1269, 2147483648
    %v1278 = vmul.f32 %v1270, 1.442695
    %v1279 = vpow.pop %v1278
    %v1280 = vmul.f32 %v1271, 1.442695
    %v1281 = vpow.pop %v1280
    %v1282 = vmul.f32 %v1272, 1.442695
    %v1283 = vpow.pop %v1282
    %v1284 = vmul.f32 %v1273, 1.442695
    %v1285 = vpow.pop %v1284
    %v1286 = vmul.f32 %v1274, 1.442695
    %v1287 = vpow.pop %v1286
    %v1288 = vmul.f32 %v1275, 1.442695
    %v1289 = vpow.pop %v1288
    %v1290 = vmul.f32 %v1276, 1.442695
    %v1291 = vpow.pop %v1290
    %v1292 = vmul.f32 %v1277, 1.442695
    %v1293 = vpow.pop %v1292
    %v1294 = vadd.f32 %v1279, 1.0
    %v1295 = vadd.f32 %v1281, 1.0
    %v1296 = vadd.f32 %v1283, 1.0
    %v1297 = vadd.f32 %v1285, 1.0
    %v1298 = vadd.f32 %v1287, 1.0
    %v1299 = vadd.f32 %v1289, 1.0
    %v1300 = vadd.f32 %v1291, 1.0
    %v1301 = vadd.f32 %v1293, 1.0
    %v1302 = vrcp.pop %v1294
    %v1303 = vmul.f32 1.0, %v1302
    %v1304 = vrcp.pop %v1295
    %v1305 = vmul.f32 1.0, %v1304
    %v1306 = vrcp.pop %v1296
    %v1307 = vmul.f32 1.0, %v1306
    %v1308 = vrcp.pop %v1297
    %v1309 = vmul.f32 1.0, %v1308
    %v1310 = vrcp.pop %v1298
    %v1311 = vmul.f32 1.0, %v1310
    %v1312 = vrcp.pop %v1299
    %v1313 = vmul.f32 1.0, %v1312
    %v1314 = vrcp.pop %v1300
    %v1315 = vmul.f32 1.0, %v1314
    %v1316 = vrcp.pop %v1301
    %v1317 = vmul.f32 1.0, %v1316
    %v1318 = vmul.f32 %v1303, 0.33333334
    %v1319 = vmul.f32 %v1305, 0.33333334
    %v1320 = vmul.f32 %v1307, 0.33333334
    %v1321 = vmul.f32 %v1309, 0.33333334
    %v1322 = vmul.f32 %v1311, 0.33333334
    %v1323 = vmul.f32 %v1313, 0.33333334
    %v1324 = vmul.f32 %v1315, 0.33333334
    %v1325 = vmul.f32 %v1317, 0.33333334
    %v1326 = vadd.f32 %v1254, %v1318
    %v1327 = vadd.f32 %v1255, %v1319
    %v1328 = vadd.f32 %v1256, %v1320
    %v1329 = vadd.f32 %v1257, %v1321
    %v1330 = vadd.f32 %v1258, %v1322
    %v1331 = vadd.f32 %v1259, %v1323
    %v1332 = vadd.f32 %v1260, %v1324
    %v1333 = vadd.f32 %v1261, %v1325
    %vm1334 = vcmp.eq.f32.partialorder %v1326, 0.0
    %vm1335 = vcmp.eq.f32.partialorder %v1327, 0.0
    %vm1336 = vcmp.eq.f32.partialorder %v1328, 0.0
    %vm1337 = vcmp.eq.f32.partialorder %v1329, 0.0
    %vm1338 = vcmp.eq.f32.partialorder %v1330, 0.0
    %vm1339 = vcmp.eq.f32.partialorder %v1331, 0.0
    %vm1340 = vcmp.eq.f32.partialorder %v1332, 0.0
    %vm1341 = vcmp.eq.f32.partialorder %v1333, 0.0
    %v1342 = vsel %vm1334, 1e-08, %v1326
    %v1343 = vsel %vm1335, 1e-08, %v1327
    %v1344 = vsel %vm1336, 1e-08, %v1328
    %v1345 = vsel %vm1337, 1e-08, %v1329
    %v1346 = vsel %vm1338, 1e-08, %v1330
    %v1347 = vsel %vm1339, 1e-08, %v1331
    %v1348 = vsel %vm1340, 1e-08, %v1332
    %v1349 = vsel %vm1341, 1e-08, %v1333
    %v1350 = vsel %vm173, %v1342, 0.0
    %v1351 = vsel %vm173, %v1343, 0.0
    %v1352 = vadd.f32 %v1350, %v1351
    %v1353 = vsel %vm173, %v1344, 0.0
    %v1354 = vadd.f32 %v1352, %v1353
    %v1355 = vsel %vm173, %v1345, 0.0
    %v1356 = vadd.f32 %v1354, %v1355
    %v1357 = vsel %vm173, %v1346, 0.0
    %v1358 = vadd.f32 %v1356, %v1357
    %v1359 = vsel %vm173, %v1347, 0.0
    %v1360 = vadd.f32 %v1358, %v1359
    %v1361 = vsel %vm173, %v1348, 0.0
    %v1362 = vadd.f32 %v1360, %v1361
    %v1363 = vsel %vm173, %v1349, 0.0
    %v1364 = vadd.f32 %v1362, %v1363
    %v1365 = vsub.f32 %v1364, %v1342
    %v1366 = vmul.f32 %v1365, 0.14285715
    %v1367 = vmul.f32 %v1342, 0.5
    %v1368 = vmul.f32 %v1366, 0.5
    %v1369 = vadd.f32 %v1367, %v1368
    %v1370 = vxor.u32 %v1369, 2147483648
    %v1371 = vmul.f32 %v1370, 1.442695
    %v1372 = vpow.pop %v1371
    %v1373 = vadd.f32 %v1372, 1.0
    %v1374 = vrcp.pop %v1373
    %v1375 = vmul.f32 1.0, %v1374
    %v1376 = vlaneseq
    %v1377 = vshrl.u32 %v1376, 7
    %v1378 = vlaneseq
    %v1379 = vand.u32 %v1378, 127
    %vm1380 = vcmp.eq.s32.totalorder %v1377, %v1379
    %v1381 = vsel %vm1380, 0.0, %v1375
    %1382 = vst.msk [vmem:[%s6] sm:$0xff] %vm173, %v1342
    %s1383 = scalar_lea.vmem %s6, 8
    %1384 = vst.msk [vmem:[%s1383] sm:$0xff] %vm173, %v1366
    %s1385 = scalar_lea.vmem %s6, 16
    %1386 = vst.msk [vmem:[%s1385] sm:$0xff] %vm173, %v1381
    // Predicated region
    $region30: #{temporal_causal_graph.1} parent=1 // pred_check
      _
    $region31: #{temporal_causal_graph.1} parent=1 // pred_check_branch
      %1388 = sbr.rel (0) target = $region33
    $region32: #{temporal_causal_graph.1} parent=1 // pred_region
      _
    $region33: #{temporal_causal_graph.1} parent=1 // pred_fallthru
      _
    // Predicated region
    $region34: #{temporal_causal_graph.1} parent=1 // pred_check
      _
    $region35: #{temporal_causal_graph.1} parent=1 // pred_check_branch
      %1390 = sbr.rel (0) target = $region37
    $region36: #{temporal_causal_graph.1} parent=1 // pred_region
      _
    $region37: #{temporal_causal_graph.1} parent=1 // pred_fallthru
      _
    %1391 = vsyncpa [#allocation3], 1

</llo_original>
